<compile_context>
chip_gen: v7x
topology: tpu7x:2x2x1
jax: 0.10.0
libtpu: 0.0.40
codegen_flags: <defaults>
</compile_context>

<pallas_src>
import jax
import jax.numpy as jnp
from jax import lax
from jax.experimental import pallas as pl
from jax.experimental.pallas import tpu as pltpu


def nafblock_kernel(x_ref, halo_ref,
                    w1_ref, b1_ref, w2_ref, b2_ref, w3_ref, b3_ref,
                    lnw_ref, lnb_ref, w4_ref, b4_ref, w5_ref, b5_ref,
                    o_ref):
    _, TH, W, C = x_ref.shape
    i = pl.program_id(1)
    nt = pl.num_programs(1)
    n = TH * W
    nh = (TH + 2) * W
    mm = w1_ref.dtype            # matmul operand dtype (bf16 prod / f32 test)

    # ---- assemble the row slab with a 1-row halo on each side (f32) ----
    x_t = x_ref[0].astype(jnp.float32)                        # (TH, W, C)
    hal = halo_ref[0, 0].astype(jnp.float32)                  # (2, W, C)
    xh = jnp.concatenate([hal[0:1], x_t, hal[1:2]], axis=0)   # (TH+2, W, C)
    rows_h = xh.reshape(nh, C)                                # channel-last rows
    shortcut = rows_h[W:W + n]                                # center rows, f32

    # ---- conv1: fused 1x1 conv C -> 2C (one MXU matmul, bf16 operands) ----
    h = jnp.dot(rows_h.astype(mm), w1_ref[...],
                preferred_element_type=jnp.float32) + b1_ref[...]

    # conv2's zero padding applies to conv1's *output*: zero the halo rows
    # that lie outside the image (first tile's top row, last tile's bottom).
    fr = lax.broadcasted_iota(jnp.int32, (nh, 1), 0)
    valid = ((fr >= W) | (i > 0)) & ((fr < (TH + 1) * W) | (i < nt - 1))
    h = jnp.where(valid, h, 0.0)

    # ---- conv2: 3x3 depthwise conv on the full 2C width (f32, VPU/XLU) ----
    k = w2_ref[...]                                           # (3, 3, 2C)
    h_t = h[0:n]                  # rows r-1
    h_m = h[W:W + n]              # rows r
    h_b = h[2 * W:2 * W + n]      # rows r+1
    c_m1 = k[0, 0] * h_t + k[1, 0] * h_m + k[2, 0] * h_b      # dx = -1 column sum
    c_0 = k[0, 1] * h_t + k[1, 1] * h_m + k[2, 1] * h_b       # dx =  0 column sum
    c_p1 = k[0, 2] * h_t + k[1, 2] * h_m + k[2, 2] * h_b      # dx = +1 column sum
    # W direction: out[w] = c_m1[w-1] + c_0[w] + c_p1[w+1], zero outside
    # [0, W).  Rolls on the flattened slab only wrap into positions that the
    # column mask zeroes anyway, so this is exact.
    ri = lax.broadcasted_iota(jnp.int32, (n, 1), 0)
    wi = (ri & (W - 1)) if (W & (W - 1)) == 0 else (ri % W)
    left = jnp.where(wi > 0, pltpu.roll(c_m1, 1, 0), 0.0)
    right = jnp.where(wi < W - 1, pltpu.roll(c_p1, n - 1, 0), 0.0)
    d = c_0 + left + right + b2_ref[...]                      # (n, 2C)

    # ---- SimpleGate (lane split of the fused result) + conv3 (1x1) ----
    g = d[:, :C] * d[:, C:]                                   # (n, C)
    t = jnp.dot(g.astype(mm), w3_ref[...],
                preferred_element_type=jnp.float32) + b3_ref[...]

    # ---- first residual ----
    xmid = shortcut + t

    # ---- norm1: WithBias LayerNorm over channels (biased variance, f32) ----
    mu = jnp.mean(xmid, axis=-1, keepdims=True)
    var = jnp.mean(jnp.square(xmid - mu), axis=-1, keepdims=True)
    y = (xmid - mu) * lax.rsqrt(var + 1e-5) * lnw_ref[...] + lnb_ref[...]

    # ---- FFN: fused conv4 (C -> 2C) -> SimpleGate -> conv5 ----
    y4 = jnp.dot(y.astype(mm), w4_ref[...],
                 preferred_element_type=jnp.float32) + b4_ref[...]
    g2 = y4[:, :C] * y4[:, C:]
    y2 = jnp.dot(g2.astype(mm), w5_ref[...],
                 preferred_element_type=jnp.float32) + b5_ref[...]

    # ---- final residual + store (dropout rate 0.0 -> identity) ----
    out = xmid + y2
    o_ref[0] = out.reshape(TH, W, C).astype(o_ref.dtype)


def _step_vmem_bytes(th, W, C):
    """Conservative per-step live-VMEM estimate (f32 working set + I/O blocks)."""
    nh = (th + 2) * W
    n = th * W
    live = 6 * nh * (2 * C) * 4          # conv1 out + dwconv column sums + temps
    live += 6 * n * (2 * C) * 4          # d / y4 / gate temporaries
    live += 10 * n * C * 4               # shortcut, g, t, xmid, y, g2, y2, out, ...
    io = 4 * th * W * C * 4 + 4 * 2 * W * C * 4   # double-buffered in/out + halo
    return live + io


def _vmem_budget_bytes():
    """Generation-aware row-tile budget (v7x: 64 MiB VMEM/TC; v5e/v6e: 128 MiB)."""
    try:
        cap = pltpu.get_tpu_info().vmem_capacity_bytes
    except Exception:
        cap = 64 << 20
    return max(8 << 20, min(40 << 20, int(0.35 * cap)))


def _pick_row_tile(H, W, C, budget_bytes):
    """Largest divisor of H (preferring multiples of 8) that fits the budget."""
    fitting = [d for d in range(1, H + 1)
               if H % d == 0 and _step_vmem_bytes(d, W, C) <= budget_bytes]
    if not fitting:
        return 1
    mult8 = [d for d in fitting if d % 8 == 0]
    return max(mult8) if mult8 else max(fitting)


def nafblock_pallas(x, params, row_tile=None, matmul_dtype=jnp.bfloat16,
                    channels_last=False):
    """NAFBlock forward.  x: (N, C, H, W) by default, or (N, H, W, C) if
    channels_last=True (keep activations NHWC between stacked blocks to skip
    the per-block transposes)."""
    if not channels_last:
        x = jnp.transpose(x, (0, 2, 3, 1))                    # -> NHWC
    N, H, W, C = x.shape
    (w1, b1, w2, b2, w3, b3, ln_w, ln_b, w4, b4, w5, b5) = params
    assert w1.shape == (C, 2 * C)

    TH = row_tile if row_tile is not None else _pick_row_tile(
        H, W, C, _vmem_budget_bytes())
    assert H % TH == 0, "row tile must divide H"
    nt = H // TH
    # v7x megacore note: both grid axes are "parallel"; the precomputed halo
    # removes cross-tile deps, so an even N*nt splits cleanly across 2 TCs.

    # 2-row halo per tile built from strided slices (no full-image pad copy):
    # top[:, i] = row i*TH-1 (zeros for i==0), bot[:, i] = row (i+1)*TH
    # (zeros for i==nt-1).
    zero_row = jnp.zeros((N, 1, W, C), x.dtype)
    top = jnp.concatenate([zero_row, x[:, TH - 1:H - 1:TH]], axis=1)  # (N, nt, W, C)
    bot = jnp.concatenate([x[:, TH:H:TH], zero_row], axis=1)         # (N, nt, W, C)
    halo = jnp.stack([top, bot], axis=2)                             # (N, nt, 2, W, C)

    # 1x1-conv weights feed the MXU: cast once to the matmul dtype (bf16 in
    # production).  Depthwise weights, biases and LN params stay f32 (VPU).
    w1m = w1.astype(matmul_dtype)
    w3m = w3.astype(matmul_dtype)
    w4m = w4.astype(matmul_dtype)
    w5m = w5.astype(matmul_dtype)
    weight_args = (w1m, b1, w2, b2, w3m, b3, ln_w, ln_b, w4m, b4, w5m, b5)

    def wspec(a):
        nd = a.ndim
        return pl.BlockSpec(a.shape, lambda ni, ti, _nd=nd: (0,) * _nd)

    est = _step_vmem_bytes(TH, W, C)
    vmem_limit = int(min(40 << 20, max(16 << 20, 2 * est)))   # 40 MiB cap: v7x-safe

    flops = int(N * H * W * (12 * C * C + 36 * C))
    bytes_accessed = int(2 * x.size * x.dtype.itemsize
                         + halo.size * halo.dtype.itemsize
                         + sum(a.size * a.dtype.itemsize for a in weight_args))
    cost = pl.CostEstimate(flops=flops, transcendentals=int(N * H * W),
                           bytes_accessed=bytes_accessed)

    out = pl.pallas_call(
        nafblock_kernel,
        out_shape=jax.ShapeDtypeStruct((N, H, W, C), x.dtype),
        grid=(N, nt),
        in_specs=[pl.BlockSpec((1, TH, W, C), lambda n, i: (n, i, 0, 0)),
                  pl.BlockSpec((1, 1, 2, W, C), lambda n, i: (n, i, 0, 0, 0))]
                 + [wspec(a) for a in weight_args],
        out_specs=pl.BlockSpec((1, TH, W, C), lambda n, i: (n, i, 0, 0)),
        compiler_params=pltpu.CompilerParams(
            dimension_semantics=("parallel", "parallel"),
            vmem_limit_bytes=vmem_limit),
        cost_estimate=cost,
    )(x, halo, *weight_args)

    if not channels_last:
        out = jnp.transpose(out, (0, 3, 1, 2))                # back to NCHW
    return out


def make_params(key, c):
    """Deterministic synthetic parameters, kernel-friendly layouts."""
    dw = 2 * c   # DW_Expand = 2
    ff = 2 * c   # FFN_Expand = 2
    ks = jax.random.split(key, 10)
    scale = 0.1
    w1 = scale * jax.random.normal(ks[0], (c, dw), jnp.float32)       # conv1 (1x1)
    b1 = scale * jax.random.normal(ks[1], (1, dw), jnp.float32)
    w2 = scale * jax.random.normal(ks[2], (3, 3, dw), jnp.float32)    # conv2 dw 3x3
    b2 = scale * jax.random.normal(ks[3], (1, dw), jnp.float32)
    w3 = scale * jax.random.normal(ks[4], (dw // 2, c), jnp.float32)  # conv3 (1x1)
    b3 = scale * jax.random.normal(ks[5], (1, c), jnp.float32)
    ln_w = jnp.ones((1, c), jnp.float32)                              # norm1 weight
    ln_b = jnp.zeros((1, c), jnp.float32)                             # norm1 bias
    w4 = scale * jax.random.normal(ks[6], (c, ff), jnp.float32)       # conv4 (1x1)
    b4 = scale * jax.random.normal(ks[7], (1, ff), jnp.float32)
    w5 = scale * jax.random.normal(ks[8], (ff // 2, c), jnp.float32)  # conv5 (1x1)
    b5 = scale * jax.random.normal(ks[9], (1, c), jnp.float32)
    # norm2 exists in __init__ but is unused in forward.
    return (w1, b1, w2, b2, w3, b3, ln_w, ln_b, w4, b4, w5, b5)


def nafblock_reference(x, params):
    """Independent pure-JAX reference (NCHW, lax convolutions)."""
    (w1, b1, w2, b2, w3, b3, ln_w, ln_b, w4, b4, w5, b5) = params
    dn = ('NCHW', 'OIHW', 'NCHW')

    def conv1x1(inp, w, b):
        wk = jnp.transpose(w, (1, 0))[:, :, None, None]
        out = lax.conv_general_dilated(inp, wk, (1, 1), 'VALID',
                                       dimension_numbers=dn)
        return out + b[0][None, :, None, None]

    def dwconv3x3(inp, w, b):
        wk = jnp.transpose(w, (2, 0, 1))[:, None, :, :]
        out = lax.conv_general_dilated(inp, wk, (1, 1), 'SAME',
                                       dimension_numbers=dn,
                                       feature_group_count=inp.shape[1])
        return out + b[0][None, :, None, None]

    def simple_gate(t):
        a, bb = jnp.split(t, 2, axis=1)
        return a * bb

    def layernorm(t, w, b):
        mu = jnp.mean(t, axis=1, keepdims=True)
        var = jnp.mean((t - mu) ** 2, axis=1, keepdims=True)
        return (t - mu) / jnp.sqrt(var + 1e-5) * w[0][None, :, None, None] \
               + b[0][None, :, None, None]

    shortcut = x
    h = conv1x1(x, w1, b1)
    h = dwconv3x3(h, w2, b2)
    h = simple_gate(h)
    h = conv1x1(h, w3, b3)
    xmid = shortcut + h
    y = layernorm(xmid, ln_w, ln_b)
    y = conv1x1(y, w4, b4)
    y = simple_gate(y)
    y = conv1x1(y, w5, b5)
    return xmid + y


if __name__ == "__main__":
    key = jax.random.PRNGKey(0)
    k_x, k_p = jax.random.split(key)

    N, C, H, W = 2, 4, 16, 16
    x = jax.random.normal(k_x, (N, C, H, W), jnp.float32)
    params = make_params(k_p, C)

    ref = jax.block_until_ready(nafblock_reference(x, params))

    # Exact path (f32 MXU operands), multi-tile: exercises the interior halo
    # and boundary-row masking with a tight tolerance (validates semantics).
    out_f32 = jax.block_until_ready(
        nafblock_pallas(x, params, row_tile=8, matmul_dtype=jnp.float32))
    assert out_f32.shape == (N, C, H, W)
    err32 = jnp.max(jnp.abs(out_f32 - ref))
    assert jnp.allclose(out_f32, ref, atol=1e-4, rtol=1e-4), \
        f"f32 max abs err {err32}"

    # Production path: bf16 MXU operands, auto-picked row tile.
    out_bf16 = jax.block_until_ready(nafblock_pallas(x, params))
    errbf = jnp.max(jnp.abs(out_bf16 - ref))
    assert jnp.allclose(out_bf16, ref, atol=5e-2, rtol=5e-2), \
        f"bf16 max abs err {errbf}"

    print("KERNEL_OK")
</pallas_src>

<mosaic_0001>
module attributes {stable_mosaic.version = 11 : i64} {
  func.func @nafblock_kernel(%arg0: i32, %arg1: i32, %arg2: memref<1x8x16x4xf32, #tpu.memory_space<vmem>>, %arg3: memref<1x1x2x16x4xf32, #tpu.memory_space<vmem>>, %arg4: memref<4x8xf32, #tpu.memory_space<vmem>>, %arg5: memref<1x8xf32, #tpu.memory_space<vmem>>, %arg6: memref<3x3x8xf32, #tpu.memory_space<vmem>>, %arg7: memref<1x8xf32, #tpu.memory_space<vmem>>, %arg8: memref<4x4xf32, #tpu.memory_space<vmem>>, %arg9: memref<1x4xf32, #tpu.memory_space<vmem>>, %arg10: memref<1x4xf32, #tpu.memory_space<vmem>>, %arg11: memref<1x4xf32, #tpu.memory_space<vmem>>, %arg12: memref<4x8xf32, #tpu.memory_space<vmem>>, %arg13: memref<1x8xf32, #tpu.memory_space<vmem>>, %arg14: memref<4x4xf32, #tpu.memory_space<vmem>>, %arg15: memref<1x4xf32, #tpu.memory_space<vmem>>, %arg16: memref<1x8x16x4xf32, #tpu.memory_space<vmem>>) attributes {dimension_semantics = [#tpu.dimension_semantics<parallel>, #tpu.dimension_semantics<parallel>], iteration_bounds = array<i64: 2, 2>, scalar_prefetch = 0 : i64, scratch_operands = 0 : i64, tpu.core_type = #tpu.core_type<tc>, window_params = [{transform_indices = @transform_0, window_bounds = array<i64: 1, 8, 16, 4>}, {transform_indices = @transform_1, window_bounds = array<i64: 1, 1, 2, 16, 4>}, {pipeline_mode = #tpu.pipeline_mode<synchronous>, transform_indices = @transform_2, window_bounds = array<i64: 4, 8>}, {pipeline_mode = #tpu.pipeline_mode<synchronous>, transform_indices = @transform_3, window_bounds = array<i64: 1, 8>}, {pipeline_mode = #tpu.pipeline_mode<synchronous>, transform_indices = @transform_4, window_bounds = array<i64: 3, 3, 8>}, {pipeline_mode = #tpu.pipeline_mode<synchronous>, transform_indices = @transform_5, window_bounds = array<i64: 1, 8>}, {pipeline_mode = #tpu.pipeline_mode<synchronous>, transform_indices = @transform_6, window_bounds = array<i64: 4, 4>}, {pipeline_mode = #tpu.pipeline_mode<synchronous>, transform_indices = @transform_7, window_bounds = array<i64: 1, 4>}, {pipeline_mode = #tpu.pipeline_mode<synchronous>, transform_indices = @transform_8, window_bounds = array<i64: 1, 4>}, {pipeline_mode = #tpu.pipeline_mode<synchronous>, transform_indices = @transform_9, window_bounds = array<i64: 1, 4>}, {pipeline_mode = #tpu.pipeline_mode<synchronous>, transform_indices = @transform_10, window_bounds = array<i64: 4, 8>}, {pipeline_mode = #tpu.pipeline_mode<synchronous>, transform_indices = @transform_11, window_bounds = array<i64: 1, 8>}, {pipeline_mode = #tpu.pipeline_mode<synchronous>, transform_indices = @transform_12, window_bounds = array<i64: 4, 4>}, {pipeline_mode = #tpu.pipeline_mode<synchronous>, transform_indices = @transform_13, window_bounds = array<i64: 1, 4>}, {transform_indices = @transform_14, window_bounds = array<i64: 1, 8, 16, 4>}]} {
    %c0 = arith.constant 0 : index
    %c0_0 = arith.constant 0 : index
    %c0_1 = arith.constant 0 : index
    %c0_2 = arith.constant 0 : index
    %0 = vector.load %arg2[%c0, %c0_0, %c0_1, %c0_2] : memref<1x8x16x4xf32, #tpu.memory_space<vmem>>, vector<1x8x16x4xf32>
    %1 = vector.shape_cast %0 : vector<1x8x16x4xf32> to vector<8x16x4xf32>
    %c0_3 = arith.constant 0 : index
    %c0_4 = arith.constant 0 : index
    %c0_5 = arith.constant 0 : index
    %c0_6 = arith.constant 0 : index
    %c0_7 = arith.constant 0 : index
    %2 = vector.load %arg3[%c0_3, %c0_4, %c0_5, %c0_6, %c0_7] : memref<1x1x2x16x4xf32, #tpu.memory_space<vmem>>, vector<1x1x2x16x4xf32>
    %3 = vector.shape_cast %2 : vector<1x1x2x16x4xf32> to vector<2x16x4xf32>
    %4 = vector.extract_strided_slice %3 {offsets = [0, 0, 0], sizes = [1, 16, 4], strides = [1, 1, 1]} : vector<2x16x4xf32> to vector<1x16x4xf32>
    %5 = vector.extract_strided_slice %3 {offsets = [1, 0, 0], sizes = [1, 16, 4], strides = [1, 1, 1]} : vector<2x16x4xf32> to vector<1x16x4xf32>
    %6 = tpu.concatenate %4, %1, %5 in 0 : vector<1x16x4xf32>, vector<8x16x4xf32>, vector<1x16x4xf32> -> vector<10x16x4xf32>
    %7 = vector.shape_cast %6 : vector<10x16x4xf32> to vector<160x4xf32>
    %8 = vector.extract_strided_slice %7 {offsets = [16, 0], sizes = [128, 4], strides = [1, 1]} : vector<160x4xf32> to vector<128x4xf32>
    %c0_8 = arith.constant 0 : index
    %c0_9 = arith.constant 0 : index
    %9 = vector.load %arg4[%c0_8, %c0_9] : memref<4x8xf32, #tpu.memory_space<vmem>>, vector<4x8xf32>
    %cst = arith.constant dense<0.000000e+00> : vector<160x8xf32>
    %10 = tpu.matmul %7, %9, %cst {dimension_numbers = #tpu.dot_dimension_numbers<[1], [0], [0], [1], [0, 0, 1, 1], [], []>} : vector<160x4xf32>, vector<4x8xf32>, vector<160x8xf32> -> vector<160x8xf32>
    %c0_10 = arith.constant 0 : index
    %c0_11 = arith.constant 0 : index
    %11 = vector.load %arg5[%c0_10, %c0_11] : memref<1x8xf32, #tpu.memory_space<vmem>>, vector<1x8xf32>
    %12 = vector.broadcast %11 : vector<1x8xf32> to vector<160x8xf32>
    %13 = arith.addf %10, %12 : vector<160x8xf32>
    %14 = tpu.iota {dimensions = array<i32: 0>} : vector<160x1xi32>
    %c16_i32 = arith.constant 16 : i32
    %15 = vector.broadcast %c16_i32 : i32 to vector<160x1xi32>
    %16 = arith.cmpi sge, %14, %15 : vector<160x1xi32>
    %c0_i32 = arith.constant 0 : i32
    %17 = arith.cmpi sgt, %arg1, %c0_i32 : i32
    %18 = vector.broadcast %17 : i1 to vector<160x1xi1>
    %19 = arith.ori %16, %18 : vector<160x1xi1>
    %c144_i32 = arith.constant 144 : i32
    %20 = vector.broadcast %c144_i32 : i32 to vector<160x1xi32>
    %21 = arith.cmpi slt, %14, %20 : vector<160x1xi32>
    %c1_i32 = arith.constant 1 : i32
    %22 = arith.cmpi slt, %arg1, %c1_i32 : i32
    %23 = vector.broadcast %22 : i1 to vector<160x1xi1>
    %24 = arith.ori %21, %23 : vector<160x1xi1>
    %25 = arith.andi %19, %24 : vector<160x1xi1>
    %cst_12 = arith.constant 0.000000e+00 : f32
    %26 = vector.shape_cast %25 : vector<160x1xi1> to vector<160x1xi1>
    %27 = vector.broadcast %26 : vector<160x1xi1> to vector<160x8xi1>
    %28 = vector.broadcast %cst_12 : f32 to vector<160x8xf32>
    %29 = arith.select %27, %13, %28 : vector<160x8xi1>, vector<160x8xf32>
    %c0_13 = arith.constant 0 : index
    %c0_14 = arith.constant 0 : index
    %c0_15 = arith.constant 0 : index
    %30 = vector.load %arg6[%c0_13, %c0_14, %c0_15] : memref<3x3x8xf32, #tpu.memory_space<vmem>>, vector<3x3x8xf32>
    %31 = vector.extract_strided_slice %29 {offsets = [0, 0], sizes = [128, 8], strides = [1, 1]} : vector<160x8xf32> to vector<128x8xf32>
    %32 = vector.extract_strided_slice %29 {offsets = [16, 0], sizes = [128, 8], strides = [1, 1]} : vector<160x8xf32> to vector<128x8xf32>
    %33 = vector.extract_strided_slice %29 {offsets = [32, 0], sizes = [128, 8], strides = [1, 1]} : vector<160x8xf32> to vector<128x8xf32>
    %34 = vector.extract_strided_slice %30 {offsets = [0, 0, 0], sizes = [1, 1, 8], strides = [1, 1, 1]} : vector<3x3x8xf32> to vector<1x1x8xf32>
    %35 = vector.shape_cast %34 : vector<1x1x8xf32> to vector<8xf32>
    %36 = vector.shape_cast %35 : vector<8xf32> to vector<1x8xf32>
    %37 = vector.broadcast %36 : vector<1x8xf32> to vector<128x8xf32>
    %38 = arith.mulf %37, %31 : vector<128x8xf32>
    %39 = vector.extract_strided_slice %30 {offsets = [1, 0, 0], sizes = [1, 1, 8], strides = [1, 1, 1]} : vector<3x3x8xf32> to vector<1x1x8xf32>
    %40 = vector.shape_cast %39 : vector<1x1x8xf32> to vector<8xf32>
    %41 = vector.shape_cast %40 : vector<8xf32> to vector<1x8xf32>
    %42 = vector.broadcast %41 : vector<1x8xf32> to vector<128x8xf32>
    %43 = arith.mulf %42, %32 : vector<128x8xf32>
    %44 = arith.addf %38, %43 : vector<128x8xf32>
    %45 = vector.extract_strided_slice %30 {offsets = [2, 0, 0], sizes = [1, 1, 8], strides = [1, 1, 1]} : vector<3x3x8xf32> to vector<1x1x8xf32>
    %46 = vector.shape_cast %45 : vector<1x1x8xf32> to vector<8xf32>
    %47 = vector.shape_cast %46 : vector<8xf32> to vector<1x8xf32>
    %48 = vector.broadcast %47 : vector<1x8xf32> to vector<128x8xf32>
    %49 = arith.mulf %48, %33 : vector<128x8xf32>
    %50 = arith.addf %44, %49 : vector<128x8xf32>
    %51 = vector.extract_strided_slice %30 {offsets = [0, 1, 0], sizes = [1, 1, 8], strides = [1, 1, 1]} : vector<3x3x8xf32> to vector<1x1x8xf32>
    %52 = vector.shape_cast %51 : vector<1x1x8xf32> to vector<8xf32>
    %53 = vector.shape_cast %52 : vector<8xf32> to vector<1x8xf32>
    %54 = vector.broadcast %53 : vector<1x8xf32> to vector<128x8xf32>
    %55 = arith.mulf %54, %31 : vector<128x8xf32>
    %56 = vector.extract_strided_slice %30 {offsets = [1, 1, 0], sizes = [1, 1, 8], strides = [1, 1, 1]} : vector<3x3x8xf32> to vector<1x1x8xf32>
    %57 = vector.shape_cast %56 : vector<1x1x8xf32> to vector<8xf32>
    %58 = vector.shape_cast %57 : vector<8xf32> to vector<1x8xf32>
    %59 = vector.broadcast %58 : vector<1x8xf32> to vector<128x8xf32>
    %60 = arith.mulf %59, %32 : vector<128x8xf32>
    %61 = arith.addf %55, %60 : vector<128x8xf32>
    %62 = vector.extract_strided_slice %30 {offsets = [2, 1, 0], sizes = [1, 1, 8], strides = [1, 1, 1]} : vector<3x3x8xf32> to vector<1x1x8xf32>
    %63 = vector.shape_cast %62 : vector<1x1x8xf32> to vector<8xf32>
    %64 = vector.shape_cast %63 : vector<8xf32> to vector<1x8xf32>
    %65 = vector.broadcast %64 : vector<1x8xf32> to vector<128x8xf32>
    %66 = arith.mulf %65, %33 : vector<128x8xf32>
    %67 = arith.addf %61, %66 : vector<128x8xf32>
    %68 = vector.extract_strided_slice %30 {offsets = [0, 2, 0], sizes = [1, 1, 8], strides = [1, 1, 1]} : vector<3x3x8xf32> to vector<1x1x8xf32>
    %69 = vector.shape_cast %68 : vector<1x1x8xf32> to vector<8xf32>
    %70 = vector.shape_cast %69 : vector<8xf32> to vector<1x8xf32>
    %71 = vector.broadcast %70 : vector<1x8xf32> to vector<128x8xf32>
    %72 = arith.mulf %71, %31 : vector<128x8xf32>
    %73 = vector.extract_strided_slice %30 {offsets = [1, 2, 0], sizes = [1, 1, 8], strides = [1, 1, 1]} : vector<3x3x8xf32> to vector<1x1x8xf32>
    %74 = vector.shape_cast %73 : vector<1x1x8xf32> to vector<8xf32>
    %75 = vector.shape_cast %74 : vector<8xf32> to vector<1x8xf32>
    %76 = vector.broadcast %75 : vector<1x8xf32> to vector<128x8xf32>
    %77 = arith.mulf %76, %32 : vector<128x8xf32>
    %78 = arith.addf %72, %77 : vector<128x8xf32>
    %79 = vector.extract_strided_slice %30 {offsets = [2, 2, 0], sizes = [1, 1, 8], strides = [1, 1, 1]} : vector<3x3x8xf32> to vector<1x1x8xf32>
    %80 = vector.shape_cast %79 : vector<1x1x8xf32> to vector<8xf32>
    %81 = vector.shape_cast %80 : vector<8xf32> to vector<1x8xf32>
    %82 = vector.broadcast %81 : vector<1x8xf32> to vector<128x8xf32>
    %83 = arith.mulf %82, %33 : vector<128x8xf32>
    %84 = arith.addf %78, %83 : vector<128x8xf32>
    %85 = tpu.iota {dimensions = array<i32: 0>} : vector<128x1xi32>
    %c15_i32 = arith.constant 15 : i32
    %86 = vector.broadcast %c15_i32 : i32 to vector<128x1xi32>
    %87 = arith.andi %85, %86 : vector<128x1xi32>
    %c0_i32_16 = arith.constant 0 : i32
    %88 = vector.broadcast %c0_i32_16 : i32 to vector<128x1xi32>
    %89 = arith.cmpi sgt, %87, %88 : vector<128x1xi32>
    %c1_i32_17 = arith.constant 1 : i32
    %90 = tpu.dynamic_rotate %50 by %c1_i32_17 dim 0 : vector<128x8xf32>, i32 -> vector<128x8xf32>
    %cst_18 = arith.constant 0.000000e+00 : f32
    %91 = vector.shape_cast %89 : vector<128x1xi1> to vector<128x1xi1>
    %92 = vector.broadcast %91 : vector<128x1xi1> to vector<128x8xi1>
    %93 = vector.broadcast %cst_18 : f32 to vector<128x8xf32>
    %94 = arith.select %92, %90, %93 : vector<128x8xi1>, vector<128x8xf32>
    %c15_i32_19 = arith.constant 15 : i32
    %95 = vector.broadcast %c15_i32_19 : i32 to vector<128x1xi32>
    %96 = arith.cmpi slt, %87, %95 : vector<128x1xi32>
    %c127_i32 = arith.constant 127 : i32
    %97 = tpu.dynamic_rotate %84 by %c127_i32 dim 0 : vector<128x8xf32>, i32 -> vector<128x8xf32>
    %cst_20 = arith.constant 0.000000e+00 : f32
    %98 = vector.shape_cast %96 : vector<128x1xi1> to vector<128x1xi1>
    %99 = vector.broadcast %98 : vector<128x1xi1> to vector<128x8xi1>
    %100 = vector.broadcast %cst_20 : f32 to vector<128x8xf32>
    %101 = arith.select %99, %97, %100 : vector<128x8xi1>, vector<128x8xf32>
    %102 = arith.addf %67, %94 : vector<128x8xf32>
    %103 = arith.addf %102, %101 : vector<128x8xf32>
    %c0_21 = arith.constant 0 : index
    %c0_22 = arith.constant 0 : index
    %104 = vector.load %arg7[%c0_21, %c0_22] : memref<1x8xf32, #tpu.memory_space<vmem>>, vector<1x8xf32>
    %105 = vector.broadcast %104 : vector<1x8xf32> to vector<128x8xf32>
    %106 = arith.addf %103, %105 : vector<128x8xf32>
    %107 = vector.extract_strided_slice %106 {offsets = [0, 0], sizes = [128, 4], strides = [1, 1]} : vector<128x8xf32> to vector<128x4xf32>
    %108 = vector.extract_strided_slice %106 {offsets = [0, 4], sizes = [128, 4], strides = [1, 1]} : vector<128x8xf32> to vector<128x4xf32>
    %109 = arith.mulf %107, %108 : vector<128x4xf32>
    %c0_23 = arith.constant 0 : index
    %c0_24 = arith.constant 0 : index
    %110 = vector.load %arg8[%c0_23, %c0_24] : memref<4x4xf32, #tpu.memory_space<vmem>>, vector<4x4xf32>
    %cst_25 = arith.constant dense<0.000000e+00> : vector<128x4xf32>
    %111 = tpu.matmul %109, %110, %cst_25 {dimension_numbers = #tpu.dot_dimension_numbers<[1], [0], [0], [1], [0, 0, 1, 1], [], []>} : vector<128x4xf32>, vector<4x4xf32>, vector<128x4xf32> -> vector<128x4xf32>
    %c0_26 = arith.constant 0 : index
    %c0_27 = arith.constant 0 : index
    %112 = vector.load %arg9[%c0_26, %c0_27] : memref<1x4xf32, #tpu.memory_space<vmem>>, vector<1x4xf32>
    %113 = vector.broadcast %112 : vector<1x4xf32> to vector<128x4xf32>
    %114 = arith.addf %111, %113 : vector<128x4xf32>
    %115 = arith.addf %8, %114 : vector<128x4xf32>
    %cst_28 = arith.constant dense<0.000000e+00> : vector<128xf32>
    %116 = vector.multi_reduction <add>, %115, %cst_28 [1] : vector<128x4xf32> to vector<128xf32>
    %117 = vector.shape_cast %116 : vector<128xf32> to vector<128x1xf32>
    %cst_29 = arith.constant 4.000000e+00 : f32
    %118 = vector.broadcast %cst_29 : f32 to vector<128x1xf32>
    %119 = arith.divf %117, %118 : vector<128x1xf32>
    %120 = vector.broadcast %119 : vector<128x1xf32> to vector<128x4xf32>
    %121 = arith.subf %115, %120 : vector<128x4xf32>
    %122 = arith.mulf %121, %121 : vector<128x4xf32>
    %cst_30 = arith.constant dense<0.000000e+00> : vector<128xf32>
    %123 = vector.multi_reduction <add>, %122, %cst_30 [1] : vector<128x4xf32> to vector<128xf32>
    %124 = vector.shape_cast %123 : vector<128xf32> to vector<128x1xf32>
    %cst_31 = arith.constant 4.000000e+00 : f32
    %125 = vector.broadcast %cst_31 : f32 to vector<128x1xf32>
    %126 = arith.divf %124, %125 : vector<128x1xf32>
    %127 = vector.broadcast %119 : vector<128x1xf32> to vector<128x4xf32>
    %128 = arith.subf %115, %127 : vector<128x4xf32>
    %cst_32 = arith.constant 9.99999974E-6 : f32
    %129 = vector.broadcast %cst_32 : f32 to vector<128x1xf32>
    %130 = arith.addf %126, %129 : vector<128x1xf32>
    %131 = math.rsqrt %130 : vector<128x1xf32>
    %132 = vector.broadcast %131 : vector<128x1xf32> to vector<128x4xf32>
    %133 = arith.mulf %128, %132 : vector<128x4xf32>
    %c0_33 = arith.constant 0 : index
    %c0_34 = arith.constant 0 : index
    %134 = vector.load %arg10[%c0_33, %c0_34] : memref<1x4xf32, #tpu.memory_space<vmem>>, vector<1x4xf32>
    %135 = vector.broadcast %134 : vector<1x4xf32> to vector<128x4xf32>
    %136 = arith.mulf %133, %135 : vector<128x4xf32>
    %c0_35 = arith.constant 0 : index
    %c0_36 = arith.constant 0 : index
    %137 = vector.load %arg11[%c0_35, %c0_36] : memref<1x4xf32, #tpu.memory_space<vmem>>, vector<1x4xf32>
    %138 = vector.broadcast %137 : vector<1x4xf32> to vector<128x4xf32>
    %139 = arith.addf %136, %138 : vector<128x4xf32>
    %c0_37 = arith.constant 0 : index
    %c0_38 = arith.constant 0 : index
    %140 = vector.load %arg12[%c0_37, %c0_38] : memref<4x8xf32, #tpu.memory_space<vmem>>, vector<4x8xf32>
    %cst_39 = arith.constant dense<0.000000e+00> : vector<128x8xf32>
    %141 = tpu.matmul %139, %140, %cst_39 {dimension_numbers = #tpu.dot_dimension_numbers<[1], [0], [0], [1], [0, 0, 1, 1], [], []>} : vector<128x4xf32>, vector<4x8xf32>, vector<128x8xf32> -> vector<128x8xf32>
    %c0_40 = arith.constant 0 : index
    %c0_41 = arith.constant 0 : index
    %142 = vector.load %arg13[%c0_40, %c0_41] : memref<1x8xf32, #tpu.memory_space<vmem>>, vector<1x8xf32>
    %143 = vector.broadcast %142 : vector<1x8xf32> to vector<128x8xf32>
    %144 = arith.addf %141, %143 : vector<128x8xf32>
    %145 = vector.extract_strided_slice %144 {offsets = [0, 0], sizes = [128, 4], strides = [1, 1]} : vector<128x8xf32> to vector<128x4xf32>
    %146 = vector.extract_strided_slice %144 {offsets = [0, 4], sizes = [128, 4], strides = [1, 1]} : vector<128x8xf32> to vector<128x4xf32>
    %147 = arith.mulf %145, %146 : vector<128x4xf32>
    %c0_42 = arith.constant 0 : index
    %c0_43 = arith.constant 0 : index
    %148 = vector.load %arg14[%c0_42, %c0_43] : memref<4x4xf32, #tpu.memory_space<vmem>>, vector<4x4xf32>
    %cst_44 = arith.constant dense<0.000000e+00> : vector<128x4xf32>
    %149 = tpu.matmul %147, %148, %cst_44 {dimension_numbers = #tpu.dot_dimension_numbers<[1], [0], [0], [1], [0, 0, 1, 1], [], []>} : vector<128x4xf32>, vector<4x4xf32>, vector<128x4xf32> -> vector<128x4xf32>
    %c0_45 = arith.constant 0 : index
    %c0_46 = arith.constant 0 : index
    %150 = vector.load %arg15[%c0_45, %c0_46] : memref<1x4xf32, #tpu.memory_space<vmem>>, vector<1x4xf32>
    %151 = vector.broadcast %150 : vector<1x4xf32> to vector<128x4xf32>
    %152 = arith.addf %149, %151 : vector<128x4xf32>
    %153 = arith.addf %115, %152 : vector<128x4xf32>
    %154 = vector.shape_cast %153 : vector<128x4xf32> to vector<8x16x4xf32>
    %c0_47 = arith.constant 0 : index
    %c0_48 = arith.constant 0 : index
    %c0_49 = arith.constant 0 : index
    %c0_50 = arith.constant 0 : index
    %155 = vector.load %arg16[%c0_47, %c0_48, %c0_49, %c0_50] : memref<1x8x16x4xf32, #tpu.memory_space<vmem>>, vector<1x8x16x4xf32>
    %156 = vector.shape_cast %155 : vector<1x8x16x4xf32> to vector<8x16x4xf32>
    %157 = vector.shape_cast %154 : vector<8x16x4xf32> to vector<1x8x16x4xf32>
    tpu.vector_store %arg16[%c0_47, %c0_48, %c0_49, %c0_50], %157 {strides = array<i32>} : memref<1x8x16x4xf32, #tpu.memory_space<vmem>>, vector<1x8x16x4xf32>,
    return
  }
  func.func @transform_0(%arg0: i32, %arg1: i32) -> (i32, i32, i32, i32) {
    %c0_i32 = arith.constant 0 : i32
    %c0_i32_0 = arith.constant 0 : i32
    %c0_i32_1 = arith.constant 0 : i32
    return %arg0, %arg1, %c0_i32, %c0_i32_0 : i32, i32, i32, i32
  }
  func.func @transform_1(%arg0: i32, %arg1: i32) -> (i32, i32, i32, i32, i32) {
    %c0_i32 = arith.constant 0 : i32
    %c0_i32_0 = arith.constant 0 : i32
    %c0_i32_1 = arith.constant 0 : i32
    %c0_i32_2 = arith.constant 0 : i32
    return %arg0, %arg1, %c0_i32, %c0_i32_0, %c0_i32_1 : i32, i32, i32, i32, i32
  }
  func.func @transform_2(%arg0: i32, %arg1: i32) -> (i32, i32) {
    %c0_i32 = arith.constant 0 : i32
    %c0_i32_0 = arith.constant 0 : i32
    %c0_i32_1 = arith.constant 0 : i32
    return %c0_i32, %c0_i32_0 : i32, i32
  }
  func.func @transform_3(%arg0: i32, %arg1: i32) -> (i32, i32) {
    %c0_i32 = arith.constant 0 : i32
    %c0_i32_0 = arith.constant 0 : i32
    %c0_i32_1 = arith.constant 0 : i32
    return %c0_i32, %c0_i32_0 : i32, i32
  }
  func.func @transform_4(%arg0: i32, %arg1: i32) -> (i32, i32, i32) {
    %c0_i32 = arith.constant 0 : i32
    %c0_i32_0 = arith.constant 0 : i32
    %c0_i32_1 = arith.constant 0 : i32
    %c0_i32_2 = arith.constant 0 : i32
    return %c0_i32, %c0_i32_0, %c0_i32_1 : i32, i32, i32
  }
  func.func @transform_5(%arg0: i32, %arg1: i32) -> (i32, i32) {
    %c0_i32 = arith.constant 0 : i32
    %c0_i32_0 = arith.constant 0 : i32
    %c0_i32_1 = arith.constant 0 : i32
    return %c0_i32, %c0_i32_0 : i32, i32
  }
  func.func @transform_6(%arg0: i32, %arg1: i32) -> (i32, i32) {
    %c0_i32 = arith.constant 0 : i32
    %c0_i32_0 = arith.constant 0 : i32
    %c0_i32_1 = arith.constant 0 : i32
    return %c0_i32, %c0_i32_0 : i32, i32
  }
  func.func @transform_7(%arg0: i32, %arg1: i32) -> (i32, i32) {
    %c0_i32 = arith.constant 0 : i32
    %c0_i32_0 = arith.constant 0 : i32
    %c0_i32_1 = arith.constant 0 : i32
    return %c0_i32, %c0_i32_0 : i32, i32
  }
  func.func @transform_8(%arg0: i32, %arg1: i32) -> (i32, i32) {
    %c0_i32 = arith.constant 0 : i32
    %c0_i32_0 = arith.constant 0 : i32
    %c0_i32_1 = arith.constant 0 : i32
    return %c0_i32, %c0_i32_0 : i32, i32
  }
  func.func @transform_9(%arg0: i32, %arg1: i32) -> (i32, i32) {
    %c0_i32 = arith.constant 0 : i32
    %c0_i32_0 = arith.constant 0 : i32
    %c0_i32_1 = arith.constant 0 : i32
    return %c0_i32, %c0_i32_0 : i32, i32
  }
  func.func @transform_10(%arg0: i32, %arg1: i32) -> (i32, i32) {
    %c0_i32 = arith.constant 0 : i32
    %c0_i32_0 = arith.constant 0 : i32
    %c0_i32_1 = arith.constant 0 : i32
    return %c0_i32, %c0_i32_0 : i32, i32
  }
  func.func @transform_11(%arg0: i32, %arg1: i32) -> (i32, i32) {
    %c0_i32 = arith.constant 0 : i32
    %c0_i32_0 = arith.constant 0 : i32
    %c0_i32_1 = arith.constant 0 : i32
    return %c0_i32, %c0_i32_0 : i32, i32
  }
  func.func @transform_12(%arg0: i32, %arg1: i32) -> (i32, i32) {
    %c0_i32 = arith.constant 0 : i32
    %c0_i32_0 = arith.constant 0 : i32
    %c0_i32_1 = arith.constant 0 : i32
    return %c0_i32, %c0_i32_0 : i32, i32
  }
  func.func @transform_13(%arg0: i32, %arg1: i32) -> (i32, i32) {
    %c0_i32 = arith.constant 0 : i32
    %c0_i32_0 = arith.constant 0 : i32
    %c0_i32_1 = arith.constant 0 : i32
    return %c0_i32, %c0_i32_0 : i32, i32
  }
  func.func @transform_14(%arg0: i32, %arg1: i32) -> (i32, i32, i32, i32) {
    %c0_i32 = arith.constant 0 : i32
    %c0_i32_0 = arith.constant 0 : i32
    %c0_i32_1 = arith.constant 0 : i32
    return %arg0, %arg1, %c0_i32, %c0_i32_0 : i32, i32, i32, i32
  }
}

</mosaic_0001>

<llo_original>
// kernel: tpu_custom_call.1
$region0: #{tpu_custom_call.1}
  #allocation0 [shape = 'u32[]', space=smem, size = 0x4, offset = 0x4, fixed_abs, tag = 'smem constant byte address 0x4 - core index']
  #allocation1 [shape = 'u32[144,128]{1,0:T(1,128)}', space=vmem, size = 0x12000, scoped, tag = 'internal scratch']
  %s0 = inlined_call_operand.vmem [shape: f32[2,16,16,4], index: 0, kind: input, shape index: {}]
  %s1 = inlined_call_operand.vmem [shape: f32[2,2,2,16,4], index: 1, kind: input, shape index: {}]
  %s2 = inlined_call_operand.vmem [shape: f32[4,8], index: 2, kind: input, shape index: {}]
  %s3 = inlined_call_operand.vmem [shape: f32[1,8], index: 3, kind: input, shape index: {}]
  %s4 = inlined_call_operand.vmem [shape: f32[3,3,8], index: 4, kind: input, shape index: {}]
  %s5 = inlined_call_operand.vmem [shape: f32[1,8], index: 5, kind: input, shape index: {}]
  %s6 = inlined_call_operand.vmem [shape: f32[4,4], index: 6, kind: input, shape index: {}]
  %s7 = inlined_call_operand.vmem [shape: f32[1,4], index: 7, kind: input, shape index: {}]
  %s8 = inlined_call_operand.vmem [shape: f32[1,4], index: 8, kind: input, shape index: {}]
  %s9 = inlined_call_operand.vmem [shape: f32[1,4], index: 9, kind: input, shape index: {}]
  %s10 = inlined_call_operand.vmem [shape: f32[4,8], index: 10, kind: input, shape index: {}]
  %s11 = inlined_call_operand.vmem [shape: f32[1,8], index: 11, kind: input, shape index: {}]
  %s12 = inlined_call_operand.vmem [shape: f32[4,4], index: 12, kind: input, shape index: {}]
  %s13 = inlined_call_operand.vmem [shape: f32[1,4], index: 13, kind: input, shape index: {}]
  %s14 = inlined_call_operand.vmem [shape: f32[2,16,16,4], index: 14, kind: output, shape index: {}]
  %s15 = sld [smem:[#allocation0]]
  $region89: #{tpu_custom_call.1} parent=0
    _
  %s17 = ssub.s32 1, %s15
  %s18 = scalar_select 0, %s17, %s15
  loop: start=0, step=1, limit=6
  $region2: #{tpu_custom_call.1} parent=0 // loop_pre_header
    _
  $region3: #{tpu_custom_call.1} parent=0 // loop_header
    %s20 = sphi 0, %s24
    %p21 = scmp.ge.s32.totalorder %s20, 6
    %s27 = sphi 0, %s39
    %s28 = sphi 0, %s35
    %s29 = sphi 0, %s27
    %s30 = sphi 0, %s28
    %s31 = sphi 0, %s29
    %s32 = sphi 0, %s30
    %s44 = sphi 0, %s46
    %s47 = sphi 0, %s44
    %s48 = sphi 0, %s47
    %s64 = sphi 0, %s48
    %s72 = sphi 0, %s74
    %s75 = sphi 0, %s72
    %s76 = sphi 0, %s75
    %s92 = sphi 0, %s76
    %s96 = sphi 0, %s96
    %s98 = sphi 0, %s96
    %s99 = sphi 0, %s98
    %s113 = sphi 0, %s99
    %s117 = sphi 0, %s117
    %s119 = sphi 0, %s117
    %s120 = sphi 0, %s119
    %s134 = sphi 0, %s120
    %s138 = sphi 0, %s138
    %s140 = sphi 0, %s138
    %s141 = sphi 0, %s140
    %s155 = sphi 0, %s141
    %s159 = sphi 0, %s159
    %s161 = sphi 0, %s159
    %s162 = sphi 0, %s161
    %s176 = sphi 0, %s162
    %s180 = sphi 0, %s180
    %s182 = sphi 0, %s180
    %s183 = sphi 0, %s182
    %s197 = sphi 0, %s183
    %s201 = sphi 0, %s201
    %s203 = sphi 0, %s201
    %s204 = sphi 0, %s203
    %s218 = sphi 0, %s204
    %s222 = sphi 0, %s222
    %s224 = sphi 0, %s222
    %s225 = sphi 0, %s224
    %s239 = sphi 0, %s225
    %s243 = sphi 0, %s243
    %s245 = sphi 0, %s243
    %s246 = sphi 0, %s245
    %s260 = sphi 0, %s246
    %s264 = sphi 0, %s264
    %s266 = sphi 0, %s264
    %s267 = sphi 0, %s266
    %s281 = sphi 0, %s267
    %s285 = sphi 0, %s285
    %s287 = sphi 0, %s285
    %s288 = sphi 0, %s287
    %s302 = sphi 0, %s288
    %s306 = sphi 0, %s306
    %s308 = sphi 0, %s306
    %s309 = sphi 0, %s308
    %s323 = sphi 0, %s309
    %s327 = sphi 0, %s327
    %s329 = sphi 0, %s327
    %s330 = sphi 0, %s329
    %s344 = sphi 0, %s330
    %s352 = sphi 0, %s354
    %s355 = sphi 0, %s352
    %s356 = sphi 0, %s355
    %s372 = sphi 0, %s356
  $region4: #{tpu_custom_call.1} parent=0 // loop_header_branch
    %23 = sbr.rel (%p21) target = $region8
  $region5: #{tpu_custom_call.1} parent=0 // loop_body
    %s25 = ssub.s32 %s20, 1
    %s26 = ssub.s32 %s20, 2
    %s33 = sadd.s32 1, %s28
    %p34 = scmp.ge.s32.totalorder %s33, 2
    %s35 = scalar_select %p34, 0, %s33
    %s36 = sadd.s32 1, %s27
    %s37 = scalar_select %p34, %s36, %s27
    %p38 = scmp.ge.s32.totalorder %s37, 2
    %s39 = scalar_select %p38, 0, %s37
    %s40 = ssub.s32 %s27, %s39
    %s41 = ssub.s32 %s28, %s35
    %s42 = sor.u32 %s40, %s41
    %p43 = scmp.eq.s32.totalorder %s42, 0
    %s45 = sadd.s32 %s44, 1
    %s46 = scalar_select %p43, %s44, %s45
    %p49 = pneg %p43
    %p50 = scmp.eq.s32.totalorder %s20, 3
    %p51 = por %p49, %p50
    %p52 = scmp.ne.s32.totalorder %s44, %s47
    %p53 = scmp.eq.s32.totalorder %s20, 0
    %p54 = por %p52, %p53
    %p55 = scmp.ne.s32.totalorder %s44, %s47
    %p56 = scmp.eq.s32.totalorder %s25, 3
    %p57 = por %p55, %p56
    %p58 = scmp.ne.s32.totalorder %s47, %s48
    %p59 = scmp.eq.s32.totalorder %s25, 0
    %p60 = por %p58, %p59
    %p61 = scmp.ne.s32.totalorder %s47, %s48
    %p62 = scmp.eq.s32.totalorder %s26, 3
    %p63 = por %p61, %p62
    %p65 = scmp.ne.s32.totalorder %s48, %s64
    %p66 = scmp.eq.s32.totalorder %s26, 0
    %p67 = por %p65, %p66
    %s68 = ssub.s32 %s27, %s39
    %s69 = ssub.s32 %s28, %s35
    %s70 = sor.u32 %s68, %s69
    %p71 = scmp.eq.s32.totalorder %s70, 0
    %s73 = sadd.s32 %s72, 1
    %s74 = scalar_select %p71, %s72, %s73
    %p77 = pneg %p71
    %p78 = scmp.eq.s32.totalorder %s20, 3
    %p79 = por %p77, %p78
    %p80 = scmp.ne.s32.totalorder %s72, %s75
    %p81 = scmp.eq.s32.totalorder %s20, 0
    %p82 = por %p80, %p81
    %p83 = scmp.ne.s32.totalorder %s72, %s75
    %p84 = scmp.eq.s32.totalorder %s25, 3
    %p85 = por %p83, %p84
    %p86 = scmp.ne.s32.totalorder %s75, %s76
    %p87 = scmp.eq.s32.totalorder %s25, 0
    %p88 = por %p86, %p87
    %p89 = scmp.ne.s32.totalorder %s75, %s76
    %p90 = scmp.eq.s32.totalorder %s26, 3
    %p91 = por %p89, %p90
    %p93 = scmp.ne.s32.totalorder %s76, %s92
    %p94 = scmp.eq.s32.totalorder %s26, 0
    %p95 = por %p93, %p94
    %s97 = sadd.s32 %s96, 1
    %p100 = scmp.eq.s32.totalorder %s20, 3
    %p101 = scmp.ne.s32.totalorder %s96, %s98
    %p102 = scmp.eq.s32.totalorder %s20, 0
    %p103 = por %p101, %p102
    %p104 = scmp.ne.s32.totalorder %s96, %s98
    %p105 = scmp.eq.s32.totalorder %s25, 3
    %p106 = por %p104, %p105
    %p107 = scmp.ne.s32.totalorder %s98, %s99
    %p108 = scmp.eq.s32.totalorder %s25, 0
    %p109 = por %p107, %p108
    %p110 = scmp.ne.s32.totalorder %s98, %s99
    %p111 = scmp.eq.s32.totalorder %s26, 3
    %p112 = por %p110, %p111
    %p114 = scmp.ne.s32.totalorder %s99, %s113
    %p115 = scmp.eq.s32.totalorder %s26, 0
    %p116 = por %p114, %p115
    %s118 = sadd.s32 %s117, 1
    %p121 = scmp.eq.s32.totalorder %s20, 3
    %p122 = scmp.ne.s32.totalorder %s117, %s119
    %p123 = scmp.eq.s32.totalorder %s20, 0
    %p124 = por %p122, %p123
    %p125 = scmp.ne.s32.totalorder %s117, %s119
    %p126 = scmp.eq.s32.totalorder %s25, 3
    %p127 = por %p125, %p126
    %p128 = scmp.ne.s32.totalorder %s119, %s120
    %p129 = scmp.eq.s32.totalorder %s25, 0
    %p130 = por %p128, %p129
    %p131 = scmp.ne.s32.totalorder %s119, %s120
    %p132 = scmp.eq.s32.totalorder %s26, 3
    %p133 = por %p131, %p132
    %p135 = scmp.ne.s32.totalorder %s120, %s134
    %p136 = scmp.eq.s32.totalorder %s26, 0
    %p137 = por %p135, %p136
    %s139 = sadd.s32 %s138, 1
    %p142 = scmp.eq.s32.totalorder %s20, 3
    %p143 = scmp.ne.s32.totalorder %s138, %s140
    %p144 = scmp.eq.s32.totalorder %s20, 0
    %p145 = por %p143, %p144
    %p146 = scmp.ne.s32.totalorder %s138, %s140
    %p147 = scmp.eq.s32.totalorder %s25, 3
    %p148 = por %p146, %p147
    %p149 = scmp.ne.s32.totalorder %s140, %s141
    %p150 = scmp.eq.s32.totalorder %s25, 0
    %p151 = por %p149, %p150
    %p152 = scmp.ne.s32.totalorder %s140, %s141
    %p153 = scmp.eq.s32.totalorder %s26, 3
    %p154 = por %p152, %p153
    %p156 = scmp.ne.s32.totalorder %s141, %s155
    %p157 = scmp.eq.s32.totalorder %s26, 0
    %p158 = por %p156, %p157
    %s160 = sadd.s32 %s159, 1
    %p163 = scmp.eq.s32.totalorder %s20, 3
    %p164 = scmp.ne.s32.totalorder %s159, %s161
    %p165 = scmp.eq.s32.totalorder %s20, 0
    %p166 = por %p164, %p165
    %p167 = scmp.ne.s32.totalorder %s159, %s161
    %p168 = scmp.eq.s32.totalorder %s25, 3
    %p169 = por %p167, %p168
    %p170 = scmp.ne.s32.totalorder %s161, %s162
    %p171 = scmp.eq.s32.totalorder %s25, 0
    %p172 = por %p170, %p171
    %p173 = scmp.ne.s32.totalorder %s161, %s162
    %p174 = scmp.eq.s32.totalorder %s26, 3
    %p175 = por %p173, %p174
    %p177 = scmp.ne.s32.totalorder %s162, %s176
    %p178 = scmp.eq.s32.totalorder %s26, 0
    %p179 = por %p177, %p178
    %s181 = sadd.s32 %s180, 1
    %p184 = scmp.eq.s32.totalorder %s20, 3
    %p185 = scmp.ne.s32.totalorder %s180, %s182
    %p186 = scmp.eq.s32.totalorder %s20, 0
    %p187 = por %p185, %p186
    %p188 = scmp.ne.s32.totalorder %s180, %s182
    %p189 = scmp.eq.s32.totalorder %s25, 3
    %p190 = por %p188, %p189
    %p191 = scmp.ne.s32.totalorder %s182, %s183
    %p192 = scmp.eq.s32.totalorder %s25, 0
    %p193 = por %p191, %p192
    %p194 = scmp.ne.s32.totalorder %s182, %s183
    %p195 = scmp.eq.s32.totalorder %s26, 3
    %p196 = por %p194, %p195
    %p198 = scmp.ne.s32.totalorder %s183, %s197
    %p199 = scmp.eq.s32.totalorder %s26, 0
    %p200 = por %p198, %p199
    %s202 = sadd.s32 %s201, 1
    %p205 = scmp.eq.s32.totalorder %s20, 3
    %p206 = scmp.ne.s32.totalorder %s201, %s203
    %p207 = scmp.eq.s32.totalorder %s20, 0
    %p208 = por %p206, %p207
    %p209 = scmp.ne.s32.totalorder %s201, %s203
    %p210 = scmp.eq.s32.totalorder %s25, 3
    %p211 = por %p209, %p210
    %p212 = scmp.ne.s32.totalorder %s203, %s204
    %p213 = scmp.eq.s32.totalorder %s25, 0
    %p214 = por %p212, %p213
    %p215 = scmp.ne.s32.totalorder %s203, %s204
    %p216 = scmp.eq.s32.totalorder %s26, 3
    %p217 = por %p215, %p216
    %p219 = scmp.ne.s32.totalorder %s204, %s218
    %p220 = scmp.eq.s32.totalorder %s26, 0
    %p221 = por %p219, %p220
    %s223 = sadd.s32 %s222, 1
    %p226 = scmp.eq.s32.totalorder %s20, 3
    %p227 = scmp.ne.s32.totalorder %s222, %s224
    %p228 = scmp.eq.s32.totalorder %s20, 0
    %p229 = por %p227, %p228
    %p230 = scmp.ne.s32.totalorder %s222, %s224
    %p231 = scmp.eq.s32.totalorder %s25, 3
    %p232 = por %p230, %p231
    %p233 = scmp.ne.s32.totalorder %s224, %s225
    %p234 = scmp.eq.s32.totalorder %s25, 0
    %p235 = por %p233, %p234
    %p236 = scmp.ne.s32.totalorder %s224, %s225
    %p237 = scmp.eq.s32.totalorder %s26, 3
    %p238 = por %p236, %p237
    %p240 = scmp.ne.s32.totalorder %s225, %s239
    %p241 = scmp.eq.s32.totalorder %s26, 0
    %p242 = por %p240, %p241
    %s244 = sadd.s32 %s243, 1
    %p247 = scmp.eq.s32.totalorder %s20, 3
    %p248 = scmp.ne.s32.totalorder %s243, %s245
    %p249 = scmp.eq.s32.totalorder %s20, 0
    %p250 = por %p248, %p249
    %p251 = scmp.ne.s32.totalorder %s243, %s245
    %p252 = scmp.eq.s32.totalorder %s25, 3
    %p253 = por %p251, %p252
    %p254 = scmp.ne.s32.totalorder %s245, %s246
    %p255 = scmp.eq.s32.totalorder %s25, 0
    %p256 = por %p254, %p255
    %p257 = scmp.ne.s32.totalorder %s245, %s246
    %p258 = scmp.eq.s32.totalorder %s26, 3
    %p259 = por %p257, %p258
    %p261 = scmp.ne.s32.totalorder %s246, %s260
    %p262 = scmp.eq.s32.totalorder %s26, 0
    %p263 = por %p261, %p262
    %s265 = sadd.s32 %s264, 1
    %p268 = scmp.eq.s32.totalorder %s20, 3
    %p269 = scmp.ne.s32.totalorder %s264, %s266
    %p270 = scmp.eq.s32.totalorder %s20, 0
    %p271 = por %p269, %p270
    %p272 = scmp.ne.s32.totalorder %s264, %s266
    %p273 = scmp.eq.s32.totalorder %s25, 3
    %p274 = por %p272, %p273
    %p275 = scmp.ne.s32.totalorder %s266, %s267
    %p276 = scmp.eq.s32.totalorder %s25, 0
    %p277 = por %p275, %p276
    %p278 = scmp.ne.s32.totalorder %s266, %s267
    %p279 = scmp.eq.s32.totalorder %s26, 3
    %p280 = por %p278, %p279
    %p282 = scmp.ne.s32.totalorder %s267, %s281
    %p283 = scmp.eq.s32.totalorder %s26, 0
    %p284 = por %p282, %p283
    %s286 = sadd.s32 %s285, 1
    %p289 = scmp.eq.s32.totalorder %s20, 3
    %p290 = scmp.ne.s32.totalorder %s285, %s287
    %p291 = scmp.eq.s32.totalorder %s20, 0
    %p292 = por %p290, %p291
    %p293 = scmp.ne.s32.totalorder %s285, %s287
    %p294 = scmp.eq.s32.totalorder %s25, 3
    %p295 = por %p293, %p294
    %p296 = scmp.ne.s32.totalorder %s287, %s288
    %p297 = scmp.eq.s32.totalorder %s25, 0
    %p298 = por %p296, %p297
    %p299 = scmp.ne.s32.totalorder %s287, %s288
    %p300 = scmp.eq.s32.totalorder %s26, 3
    %p301 = por %p299, %p300
    %p303 = scmp.ne.s32.totalorder %s288, %s302
    %p304 = scmp.eq.s32.totalorder %s26, 0
    %p305 = por %p303, %p304
    %s307 = sadd.s32 %s306, 1
    %p310 = scmp.eq.s32.totalorder %s20, 3
    %p311 = scmp.ne.s32.totalorder %s306, %s308
    %p312 = scmp.eq.s32.totalorder %s20, 0
    %p313 = por %p311, %p312
    %p314 = scmp.ne.s32.totalorder %s306, %s308
    %p315 = scmp.eq.s32.totalorder %s25, 3
    %p316 = por %p314, %p315
    %p317 = scmp.ne.s32.totalorder %s308, %s309
    %p318 = scmp.eq.s32.totalorder %s25, 0
    %p319 = por %p317, %p318
    %p320 = scmp.ne.s32.totalorder %s308, %s309
    %p321 = scmp.eq.s32.totalorder %s26, 3
    %p322 = por %p320, %p321
    %p324 = scmp.ne.s32.totalorder %s309, %s323
    %p325 = scmp.eq.s32.totalorder %s26, 0
    %p326 = por %p324, %p325
    %s328 = sadd.s32 %s327, 1
    %p331 = scmp.eq.s32.totalorder %s20, 3
    %p332 = scmp.ne.s32.totalorder %s327, %s329
    %p333 = scmp.eq.s32.totalorder %s20, 0
    %p334 = por %p332, %p333
    %p335 = scmp.ne.s32.totalorder %s327, %s329
    %p336 = scmp.eq.s32.totalorder %s25, 3
    %p337 = por %p335, %p336
    %p338 = scmp.ne.s32.totalorder %s329, %s330
    %p339 = scmp.eq.s32.totalorder %s25, 0
    %p340 = por %p338, %p339
    %p341 = scmp.ne.s32.totalorder %s329, %s330
    %p342 = scmp.eq.s32.totalorder %s26, 3
    %p343 = por %p341, %p342
    %p345 = scmp.ne.s32.totalorder %s330, %s344
    %p346 = scmp.eq.s32.totalorder %s26, 0
    %p347 = por %p345, %p346
    %s348 = ssub.s32 %s27, %s39
    %s349 = ssub.s32 %s28, %s35
    %s350 = sor.u32 %s348, %s349
    %p351 = scmp.eq.s32.totalorder %s350, 0
    %s353 = sadd.s32 %s352, 1
    %s354 = scalar_select %p351, %s352, %s353
    %p357 = pneg %p351
    %p358 = scmp.eq.s32.totalorder %s20, 3
    %p359 = por %p357, %p358
    %p360 = scmp.ne.s32.totalorder %s352, %s355
    %p361 = scmp.eq.s32.totalorder %s20, 0
    %p362 = por %p360, %p361
    %p363 = scmp.ne.s32.totalorder %s352, %s355
    %p364 = scmp.eq.s32.totalorder %s25, 3
    %p365 = por %p363, %p364
    %p366 = scmp.ne.s32.totalorder %s355, %s356
    %p367 = scmp.eq.s32.totalorder %s25, 0
    %p368 = por %p366, %p367
    %p369 = scmp.ne.s32.totalorder %s355, %s356
    %p370 = scmp.eq.s32.totalorder %s26, 3
    %p371 = por %p369, %p370
    %p373 = scmp.ne.s32.totalorder %s356, %s372
    %p374 = scmp.eq.s32.totalorder %s26, 0
    %p375 = por %p373, %p374
    %p376 = scmp.le.s32.totalorder 1, %s20
    %p377 = scmp.lt.s32.totalorder %s20, 5
    %p378 = pnand %p376, %p377
    %p379 = pneg %p378
    // Predicated region
    $region9: #{tpu_custom_call.1} parent=5 // pred_check
      _
    $region10: #{tpu_custom_call.1} parent=5 // pred_check_branch
      %381 = sbr.rel (%p378) target = $region12
    $region11: #{tpu_custom_call.1} parent=5 // pred_region
      %s382 = ssub.s32 %s20, 1
      // Predicated region
      $region13: #{tpu_custom_call.1} parent=11 // pred_check
        %p383 = pneg %p109
      $region14: #{tpu_custom_call.1} parent=11 // pred_check_branch
        %385 = sbr.rel (%p383) target = $region16
      $region15: #{tpu_custom_call.1} parent=11 // pred_region
        _
      $region16: #{tpu_custom_call.1} parent=11 // pred_fallthru
        _
      // Predicated region
      $region17: #{tpu_custom_call.1} parent=11 // pred_check
        %p386 = pneg %p130
      $region18: #{tpu_custom_call.1} parent=11 // pred_check_branch
        %388 = sbr.rel (%p386) target = $region20
      $region19: #{tpu_custom_call.1} parent=11 // pred_region
        _
      $region20: #{tpu_custom_call.1} parent=11 // pred_fallthru
        _
      // Predicated region
      $region21: #{tpu_custom_call.1} parent=11 // pred_check
        %p389 = pneg %p151
      $region22: #{tpu_custom_call.1} parent=11 // pred_check_branch
        %391 = sbr.rel (%p389) target = $region24
      $region23: #{tpu_custom_call.1} parent=11 // pred_region
        _
      $region24: #{tpu_custom_call.1} parent=11 // pred_fallthru
        _
      // Predicated region
      $region25: #{tpu_custom_call.1} parent=11 // pred_check
        %p392 = pneg %p172
      $region26: #{tpu_custom_call.1} parent=11 // pred_check_branch
        %394 = sbr.rel (%p392) target = $region28
      $region27: #{tpu_custom_call.1} parent=11 // pred_region
        _
      $region28: #{tpu_custom_call.1} parent=11 // pred_fallthru
        _
      // Predicated region
      $region29: #{tpu_custom_call.1} parent=11 // pred_check
        %p395 = pneg %p193
      $region30: #{tpu_custom_call.1} parent=11 // pred_check_branch
        %397 = sbr.rel (%p395) target = $region32
      $region31: #{tpu_custom_call.1} parent=11 // pred_region
        _
      $region32: #{tpu_custom_call.1} parent=11 // pred_fallthru
        _
      // Predicated region
      $region33: #{tpu_custom_call.1} parent=11 // pred_check
        %p398 = pneg %p214
      $region34: #{tpu_custom_call.1} parent=11 // pred_check_branch
        %400 = sbr.rel (%p398) target = $region36
      $region35: #{tpu_custom_call.1} parent=11 // pred_region
        _
      $region36: #{tpu_custom_call.1} parent=11 // pred_fallthru
        _
      // Predicated region
      $region37: #{tpu_custom_call.1} parent=11 // pred_check
        %p401 = pneg %p235
      $region38: #{tpu_custom_call.1} parent=11 // pred_check_branch
        %403 = sbr.rel (%p401) target = $region40
      $region39: #{tpu_custom_call.1} parent=11 // pred_region
        _
      $region40: #{tpu_custom_call.1} parent=11 // pred_fallthru
        _
      // Predicated region
      $region41: #{tpu_custom_call.1} parent=11 // pred_check
        %p404 = pneg %p256
      $region42: #{tpu_custom_call.1} parent=11 // pred_check_branch
        %406 = sbr.rel (%p404) target = $region44
      $region43: #{tpu_custom_call.1} parent=11 // pred_region
        _
      $region44: #{tpu_custom_call.1} parent=11 // pred_fallthru
        _
      // Predicated region
      $region45: #{tpu_custom_call.1} parent=11 // pred_check
        %p407 = pneg %p277
      $region46: #{tpu_custom_call.1} parent=11 // pred_check_branch
        %409 = sbr.rel (%p407) target = $region48
      $region47: #{tpu_custom_call.1} parent=11 // pred_region
        _
      $region48: #{tpu_custom_call.1} parent=11 // pred_fallthru
        _
      // Predicated region
      $region49: #{tpu_custom_call.1} parent=11 // pred_check
        %p410 = pneg %p298
      $region50: #{tpu_custom_call.1} parent=11 // pred_check_branch
        %412 = sbr.rel (%p410) target = $region52
      $region51: #{tpu_custom_call.1} parent=11 // pred_region
        _
      $region52: #{tpu_custom_call.1} parent=11 // pred_fallthru
        _
      // Predicated region
      $region53: #{tpu_custom_call.1} parent=11 // pred_check
        %p413 = pneg %p319
      $region54: #{tpu_custom_call.1} parent=11 // pred_check_branch
        %415 = sbr.rel (%p413) target = $region56
      $region55: #{tpu_custom_call.1} parent=11 // pred_region
        _
      $region56: #{tpu_custom_call.1} parent=11 // pred_fallthru
        _
      // Predicated region
      $region57: #{tpu_custom_call.1} parent=11 // pred_check
        %p416 = pneg %p340
      $region58: #{tpu_custom_call.1} parent=11 // pred_check_branch
        %418 = sbr.rel (%p416) target = $region60
      $region59: #{tpu_custom_call.1} parent=11 // pred_region
        _
      $region60: #{tpu_custom_call.1} parent=11 // pred_fallthru
        _
    $region12: #{tpu_custom_call.1} parent=5 // pred_fallthru
      _
    %p419 = scmp.lt.s32.totalorder %s20, 4
    // Predicated region
    $region61: #{tpu_custom_call.1} parent=5 // pred_check
      %p420 = pneg %p419
    $region62: #{tpu_custom_call.1} parent=5 // pred_check_branch
      %422 = sbr.rel (%p420) target = $region64
    $region63: #{tpu_custom_call.1} parent=5 // pred_region
      // Predicated region
      $region65: #{tpu_custom_call.1} parent=63 // pred_check
        %p423 = pneg %p54
      $region66: #{tpu_custom_call.1} parent=63 // pred_check_branch
        %425 = sbr.rel (%p423) target = $region68
      $region67: #{tpu_custom_call.1} parent=63 // pred_region
        %s426 = smul.u32 8, %s28
        %p427 = scmp.lt.s32.totalorder %s27, 1
        %s428 = scalar_select %p427, %s27, 1
        %p429 = scmp.lt.s32.totalorder %s426, 15
        %s430 = scalar_select %p429, %s426, 15
        %s431 = smul.addr %s430, 2
        %s432 = smul.addr %s428, 32
        %s433 = sadd.s32 %s431, %s432
        %s434 = smul.addr %s433, 8
        %s435 = scalar_lea.vmem %s0, %s434
        %s436 = smul.u32 8, %s28
      $region68: #{tpu_custom_call.1} parent=63 // pred_fallthru
        _
      // Predicated region
      $region69: #{tpu_custom_call.1} parent=63 // pred_check
        %p437 = pneg %p82
      $region70: #{tpu_custom_call.1} parent=63 // pred_check_branch
        %439 = sbr.rel (%p437) target = $region72
      $region71: #{tpu_custom_call.1} parent=63 // pred_region
        %p440 = scmp.lt.s32.totalorder %s27, 1
        %s441 = scalar_select %p440, %s27, 1
        %p442 = scmp.lt.s32.totalorder %s28, 1
        %s443 = scalar_select %p442, %s28, 1
        %s444 = smul.addr %s443, 4
        %s445 = smul.addr %s441, 8
        %s446 = sadd.s32 %s444, %s445
        %s447 = smul.addr %s446, 8
        %s448 = scalar_lea.vmem %s1, %s447
      $region72: #{tpu_custom_call.1} parent=63 // pred_fallthru
        _
    $region64: #{tpu_custom_call.1} parent=5 // pred_fallthru
      _
    %p449 = scmp.le.s32.totalorder 1, %s20
    %p450 = scmp.lt.s32.totalorder %s20, 5
    %p451 = pnand %p449, %p450
    %p452 = pneg %p451
    // Predicated region
    $region73: #{tpu_custom_call.1} parent=5 // pred_check
      _
    $region74: #{tpu_custom_call.1} parent=5 // pred_check_branch
      %454 = sbr.rel (%p451) target = $region76
    $region75: #{tpu_custom_call.1} parent=5 // pred_region
      %s455 = ssub.s32 %s20, 1
      %s456 = smul.u32 8, %s30
      %p457 = scmp.lt.s32.totalorder %s29, 1
      %s458 = scalar_select %p457, %s29, 1
      %p459 = scmp.lt.s32.totalorder %s456, 15
      %s460 = scalar_select %p459, %s456, 15
      %s461 = smul.addr %s460, 2
      %s462 = smul.addr %s458, 32
      %s463 = sadd.s32 %s461, %s462
      %s464 = smul.addr %s463, 8
      %s465 = scalar_lea.vmem %s0, %s464
      %p466 = pneg %p60
      %p467 = pneg %p57
      %p468 = scmp.lt.s32.totalorder %s29, 1
      %s469 = scalar_select %p468, %s29, 1
      %p470 = scmp.lt.s32.totalorder %s30, 1
      %s471 = scalar_select %p470, %s30, 1
      %s472 = smul.addr %s471, 4
      %s473 = smul.addr %s469, 8
      %s474 = sadd.s32 %s472, %s473
      %s475 = smul.addr %s474, 8
      %s476 = scalar_lea.vmem %s1, %s475
      %p477 = pneg %p88
      %p478 = pneg %p85
      %p479 = pneg %p109
      %p480 = pneg %p106
      %p481 = pneg %p130
      %p482 = pneg %p127
      %p483 = pneg %p151
      %p484 = pneg %p148
      %p485 = pneg %p172
      %p486 = pneg %p169
      %p487 = pneg %p193
      %p488 = pneg %p190
      %p489 = pneg %p214
      %p490 = pneg %p211
      %p491 = pneg %p235
      %p492 = pneg %p232
      %p493 = pneg %p256
      %p494 = pneg %p253
      %p495 = pneg %p277
      %p496 = pneg %p274
      %p497 = pneg %p298
      %p498 = pneg %p295
      %p499 = pneg %p319
      %p500 = pneg %p316
      %p501 = pneg %p340
      %p502 = pneg %p337
      %p503 = pneg %p368
      %p504 = pneg %p365
      %s505 = smul.u32 8, %s30
      %p506 = scmp.lt.s32.totalorder %s29, 1
      %s507 = scalar_select %p506, %s29, 1
      %p508 = scmp.lt.s32.totalorder %s505, 15
      %s509 = scalar_select %p508, %s505, 15
      %s510 = smul.addr %s509, 2
      %s511 = smul.addr %s507, 32
      %s512 = sadd.s32 %s510, %s511
      %s513 = smul.addr %s512, 8
      %s514 = scalar_lea.vmem %s14, %s513
      %s515 = smul.u32 8, %s30
      %p516 = scmp.lt.s32.totalorder %s29, 1
      %s517 = scalar_select %p516, %s29, 1
      %p518 = scmp.lt.s32.totalorder %s515, 15
      %s519 = scalar_select %p518, %s515, 15
      %s520 = smul.addr %s519, 2
      %s521 = smul.addr %s517, 32
      %s522 = sadd.s32 %s520, %s521
      %s523 = smul.addr %s522, 8
      %s524 = scalar_lea.vmem %s0, %s523
      %s525 = smul.u32 8, %s30
      %p526 = scmp.lt.s32.totalorder %s29, 1
      %s527 = scalar_select %p526, %s29, 1
      %p528 = scmp.lt.s32.totalorder %s30, 1
      %s529 = scalar_select %p528, %s30, 1
      %s530 = smul.addr %s529, 4
      %s531 = smul.addr %s527, 8
      %s532 = sadd.s32 %s530, %s531
      %s533 = smul.addr %s532, 8
      %s534 = scalar_lea.vmem %s1, %s533
      %s535 = smul.u32 8, %s30
      %p536 = scmp.lt.s32.totalorder %s29, 1
      %s537 = scalar_select %p536, %s29, 1
      %p538 = scmp.lt.s32.totalorder %s535, 15
      %s539 = scalar_select %p538, %s535, 15
      %s540 = smul.addr %s539, 2
      %s541 = smul.addr %s537, 32
      %s542 = sadd.s32 %s540, %s541
      %s543 = smul.addr %s542, 8
      %s544 = scalar_lea.vmem %s14, %s543
      %s545 = smul.u32 8, %s30
      %v546 = vld [vmem:[%s524] sm:$0xff]
      %v547 = vld [vmem:[%s524 + $0x8] sm:$0xff]
      %v548 = vld [vmem:[%s524 + $0x10] sm:$0xff]
      %v549 = vld [vmem:[%s524 + $0x18] sm:$0xff]
      %v550 = vld [vmem:[%s524 + $0x20] sm:$0xff]
      %v551 = vld [vmem:[%s524 + $0x28] sm:$0xff]
      %v552 = vld [vmem:[%s524 + $0x30] sm:$0xff]
      %v553 = vld [vmem:[%s524 + $0x38] sm:$0xff]
      %v554 = vld [vmem:[%s524 + $0x40] sm:$0xff]
      %v555 = vld [vmem:[%s524 + $0x48] sm:$0xff]
      %v556 = vld [vmem:[%s524 + $0x50] sm:$0xff]
      %v557 = vld [vmem:[%s524 + $0x58] sm:$0xff]
      %v558 = vld [vmem:[%s524 + $0x60] sm:$0xff]
      %v559 = vld [vmem:[%s524 + $0x68] sm:$0xff]
      %v560 = vld [vmem:[%s524 + $0x70] sm:$0xff]
      %v561 = vld [vmem:[%s524 + $0x78] sm:$0xff]
      %v562 = vld [vmem:[%s534] sm:$0xff]
      %v563 = vld [vmem:[%s534 + $0x8] sm:$0xff]
      %v564 = vld [vmem:[%s534 + $0x10] sm:$0xff]
      %v565 = vld [vmem:[%s534 + $0x18] sm:$0xff]
      %v566 = vld [vmem:[%s2] sm:$0xf]
      %v567 = vld [vmem:[%s3] sm:$0x1]
      %v569 = vlaneseq
      %v570 = vshrl.u32 %v569, 7
      %v571 = vsub.s32 0, %v570
      %v572 = vrot.slane %v567, %v571
      %vm574 = vcmask 31744
      %v576 = vsel %vm574, %v562, 0
      %v579 = vsel %vm574, %v563, 0
      %v582 = vsel %vm574, %v546, 0
      %v585 = vsel %vm574, %v547, 0
      %v588 = vsel %vm574, %v548, 0
      %v591 = vsel %vm574, %v549, 0
      %v594 = vsel %vm574, %v550, 0
      %v597 = vsel %vm574, %v551, 0
      %v600 = vsel %vm574, %v552, 0
      %v603 = vsel %vm574, %v553, 0
      %v606 = vsel %vm574, %v554, 0
      %v609 = vsel %vm574, %v555, 0
      %v612 = vsel %vm574, %v556, 0
      %v615 = vsel %vm574, %v557, 0
      %v618 = vsel %vm574, %v558, 0
      %v621 = vsel %vm574, %v559, 0
      %v624 = vsel %vm574, %v560, 0
      %v627 = vsel %vm574, %v561, 0
      %v630 = vsel %vm574, %v564, 0
      %v633 = vsel %vm574, %v565, 0
      %vm635 = vcmask 1043456
      %v637 = vsel %vm635, %v566, 0
      %639 = vmatprep.subr.mxu0 0.0
      %640 = vmatpush1.msra.mxu0 %v637
      %641 = vmatprep.subr.mxu0 0.0
      %642 = vmatpush1.msra.mxu0 0.0
      %643 = vmatprep.subr.mxu0 0.0
      %644 = vmatpush1.msra.mxu0 0.0
      %645 = vmatprep.subr.mxu0 0.0
      %646 = vmatpush1.msra.mxu0 0.0
      %647 = vmatprep.subr.mxu0 0.0
      %648 = vmatpush1.msra.mxu0 0.0
      %649 = vmatprep.subr.mxu0 0.0
      %650 = vmatpush1.msra.mxu0 0.0
      %651 = vmatprep.subr.mxu0 0.0
      %652 = vmatpush1.msra.mxu0 0.0
      %653 = vmatprep.subr.mxu0 0.0
      %654 = vmatpush1.msra.mxu0 0.0
      %655 = vmatprep.subr.mxu0 0.0
      %656 = vmatpush1.msra.mxu0 0.0
      %657 = vmatprep.subr.mxu0 0.0
      %658 = vmatpush1.msra.mxu0 0.0
      %659 = vmatprep.subr.mxu0 0.0
      %660 = vmatpush1.msra.mxu0 0.0
      %661 = vmatprep.subr.mxu0 0.0
      %662 = vmatpush1.msra.mxu0 0.0
      %663 = vmatprep.subr.mxu0 0.0
      %664 = vmatpush1.msra.mxu0 0.0
      %665 = vmatprep.subr.mxu0 0.0
      %666 = vmatpush1.msra.mxu0 0.0
      %667 = vmatprep.subr.mxu0 0.0
      %668 = vmatpush1.msra.mxu0 0.0
      %669 = vmatprep.subr.mxu0 0.0
      %670 = vmatpush1.msra.mxu0 0.0
      %671 = vmatprep.subr.mxu0 0.0
      %672 = vmatpush1.msra.mxu0 0.0
      %673 = vmatprep.subr.mxu0 0.0
      %674 = vmatpush1.msra.mxu0 0.0
      %675 = vmatprep.subr.mxu0 0.0
      %676 = vmatpush1.msra.mxu0 0.0
      %677 = vmatprep.subr.mxu0 0.0
      %678 = vmatpush1.msra.mxu0 0.0
      %679 = vmatprep.subr.mxu0 0.0
      %680 = vmatpush1.msra.mxu0 0.0
      %681 = vmatprep.subr.mxu0 0.0
      %682 = vmatpush1.msra.mxu0 0.0
      %683 = vmatprep.subr.mxu0 0.0
      %684 = vmatpush1.msra.mxu0 0.0
      %685 = vmatprep.subr.mxu0 0.0
      %686 = vmatpush1.msra.mxu0 0.0
      %687 = vmatprep.subr.mxu0 0.0
      %688 = vmatpush1.msra.mxu0 0.0
      %689 = vmatprep.subr.mxu0 0.0
      %690 = vmatpush1.msra.mxu0 0.0
      %691 = vmatprep.subr.mxu0 0.0
      %692 = vmatpush1.msra.mxu0 0.0
      %693 = vmatprep.subr.mxu0 0.0
      %694 = vmatpush1.msra.mxu0 0.0
      %695 = vmatprep.subr.mxu0 0.0
      %696 = vmatpush1.msra.mxu0 0.0
      %697 = vmatprep.subr.mxu0 0.0
      %698 = vmatpush1.msra.mxu0 0.0
      %699 = vmatprep.subr.mxu0 0.0
      %700 = vmatpush1.msra.mxu0 0.0
      %701 = vmatprep.subr.mxu0 0.0
      %702 = vmatpush1.msra.mxu0 0.0
      %703 = vmatprep.mubr.f32.mxu0 0.0
      %704 = vmatmul.mubr.f32.gmra.mrb[0].mxu0 %v576
      %v705 = vpop.f32.mrb[0].mxu0
      %v706 = vadd.f32 %v572, %v705
      %v707 = vpop.f32.mrb[0].mxu0
      %708 = vmatprep.mubr.f32.mxu0 0.0
      %709 = vmatmul.mubr.f32.gmra.mrb[0].mxu0 %v579
      %v710 = vpop.f32.mrb[0].mxu0
      %v711 = vadd.f32 %v572, %v710
      %v712 = vpop.f32.mrb[0].mxu0
      %713 = vmatprep.mubr.f32.mxu0 0.0
      %714 = vmatmul.mubr.f32.gmra.mrb[0].mxu0 %v582
      %v715 = vpop.f32.mrb[0].mxu0
      %v716 = vadd.f32 %v572, %v715
      %v717 = vpop.f32.mrb[0].mxu0
      %718 = vmatprep.mubr.f32.mxu0 0.0
      %719 = vmatmul.mubr.f32.gmra.mrb[0].mxu0 %v585
      %v720 = vpop.f32.mrb[0].mxu0
      %v721 = vadd.f32 %v572, %v720
      %v722 = vpop.f32.mrb[0].mxu0
      %723 = vmatprep.mubr.f32.mxu0 0.0
      %724 = vmatmul.mubr.f32.gmra.mrb[0].mxu0 %v588
      %v725 = vpop.f32.mrb[0].mxu0
      %v726 = vadd.f32 %v572, %v725
      %v727 = vpop.f32.mrb[0].mxu0
      %728 = vmatprep.mubr.f32.mxu0 0.0
      %729 = vmatmul.mubr.f32.gmra.mrb[0].mxu0 %v591
      %v730 = vpop.f32.mrb[0].mxu0
      %v731 = vadd.f32 %v572, %v730
      %v732 = vpop.f32.mrb[0].mxu0
      %733 = vmatprep.mubr.f32.mxu0 0.0
      %734 = vmatmul.mubr.f32.gmra.mrb[0].mxu0 %v594
      %v735 = vpop.f32.mrb[0].mxu0
      %v736 = vadd.f32 %v572, %v735
      %v737 = vpop.f32.mrb[0].mxu0
      %738 = vmatprep.mubr.f32.mxu0 0.0
      %739 = vmatmul.mubr.f32.gmra.mrb[0].mxu0 %v597
      %v740 = vpop.f32.mrb[0].mxu0
      %v741 = vadd.f32 %v572, %v740
      %v742 = vpop.f32.mrb[0].mxu0
      %743 = vmatprep.mubr.f32.mxu0 0.0
      %744 = vmatmul.mubr.f32.gmra.mrb[0].mxu0 %v600
      %v745 = vpop.f32.mrb[0].mxu0
      %v746 = vadd.f32 %v572, %v745
      %v747 = vpop.f32.mrb[0].mxu0
      %748 = vmatprep.mubr.f32.mxu0 0.0
      %749 = vmatmul.mubr.f32.gmra.mrb[0].mxu0 %v603
      %v750 = vpop.f32.mrb[0].mxu0
      %v751 = vadd.f32 %v572, %v750
      %v752 = vpop.f32.mrb[0].mxu0
      %753 = vmatprep.mubr.f32.mxu0 0.0
      %754 = vmatmul.mubr.f32.gmra.mrb[0].mxu0 %v606
      %v755 = vpop.f32.mrb[0].mxu0
      %v756 = vadd.f32 %v572, %v755
      %v757 = vpop.f32.mrb[0].mxu0
      %758 = vmatprep.mubr.f32.mxu0 0.0
      %759 = vmatmul.mubr.f32.gmra.mrb[0].mxu0 %v609
      %v760 = vpop.f32.mrb[0].mxu0
      %v761 = vadd.f32 %v572, %v760
      %v762 = vpop.f32.mrb[0].mxu0
      %763 = vmatprep.mubr.f32.mxu0 0.0
      %764 = vmatmul.mubr.f32.gmra.mrb[0].mxu0 %v612
      %v765 = vpop.f32.mrb[0].mxu0
      %v766 = vadd.f32 %v572, %v765
      %v767 = vpop.f32.mrb[0].mxu0
      %768 = vmatprep.mubr.f32.mxu0 0.0
      %769 = vmatmul.mubr.f32.gmra.mrb[0].mxu0 %v615
      %v770 = vpop.f32.mrb[0].mxu0
      %v771 = vadd.f32 %v572, %v770
      %v772 = vpop.f32.mrb[0].mxu0
      %773 = vmatprep.mubr.f32.mxu0 0.0
      %774 = vmatmul.mubr.f32.gmra.mrb[0].mxu0 %v618
      %v775 = vpop.f32.mrb[0].mxu0
      %v776 = vadd.f32 %v572, %v775
      %v777 = vpop.f32.mrb[0].mxu0
      %778 = vmatprep.mubr.f32.mxu0 0.0
      %779 = vmatmul.mubr.f32.gmra.mrb[0].mxu0 %v621
      %v780 = vpop.f32.mrb[0].mxu0
      %v781 = vadd.f32 %v572, %v780
      %v782 = vpop.f32.mrb[0].mxu0
      %783 = vmatprep.mubr.f32.mxu0 0.0
      %784 = vmatmul.mubr.f32.gmra.mrb[0].mxu0 %v624
      %v785 = vpop.f32.mrb[0].mxu0
      %v786 = vadd.f32 %v572, %v785
      %v787 = vpop.f32.mrb[0].mxu0
      %788 = vmatprep.mubr.f32.mxu0 0.0
      %789 = vmatmul.mubr.f32.gmra.mrb[0].mxu0 %v627
      %v790 = vpop.f32.mrb[0].mxu0
      %v791 = vadd.f32 %v572, %v790
      %v792 = vpop.f32.mrb[0].mxu0
      %793 = vmatprep.mubr.f32.mxu0 0.0
      %794 = vmatmul.mubr.f32.gmra.mrb[0].mxu0 %v630
      %v795 = vpop.f32.mrb[0].mxu0
      %v796 = vadd.f32 %v572, %v795
      %v797 = vpop.f32.mrb[0].mxu0
      %798 = vmatprep.mubr.f32.mxu0 0.0
      %799 = vmatmul.mubr.f32.gmra.mrb[0].mxu0 %v633
      %v800 = vpop.f32.mrb[0].mxu0
      %v801 = vadd.f32 %v572, %v800
      %v802 = vpop.f32.mrb[0].mxu0
      %803 = vdwg.mxu0
      %v804 = vlaneseq
      %v805 = vshrl.u32 %v804, 7
      %v806 = vadd.s32 %v805, 8
      %v807 = vadd.s32 %v805, 16
      %v808 = vadd.s32 %v805, 24
      %v809 = vadd.s32 %v805, 32
      %v810 = vadd.s32 %v805, 40
      %v811 = vadd.s32 %v805, 48
      %v812 = vadd.s32 %v805, 56
      %v813 = vadd.s32 %v805, 64
      %v814 = vadd.s32 %v805, 72
      %v815 = vadd.s32 %v805, 80
      %v816 = vadd.s32 %v805, 88
      %v817 = vadd.s32 %v805, 96
      %v818 = vadd.s32 %v805, 104
      %v819 = vadd.s32 %v805, 112
      %v820 = vadd.s32 %v805, 120
      %v821 = vadd.s32 %v805, 128
      %v822 = vadd.s32 %v805, 136
      %v823 = vadd.s32 %v805, 144
      %v824 = vadd.s32 %v805, 152
      %vm825 = vcmp.ge.s32.totalorder %v805, 16
      %vm826 = vcmp.ge.s32.totalorder %v806, 16
      %vm827 = vcmp.ge.s32.totalorder %v807, 16
      %vm828 = vcmp.ge.s32.totalorder %v808, 16
      %vm829 = vcmp.ge.s32.totalorder %v809, 16
      %vm830 = vcmp.ge.s32.totalorder %v810, 16
      %vm831 = vcmp.ge.s32.totalorder %v811, 16
      %vm832 = vcmp.ge.s32.totalorder %v812, 16
      %vm833 = vcmp.ge.s32.totalorder %v813, 16
      %vm834 = vcmp.ge.s32.totalorder %v814, 16
      %vm835 = vcmp.ge.s32.totalorder %v815, 16
      %vm836 = vcmp.ge.s32.totalorder %v816, 16
      %vm837 = vcmp.ge.s32.totalorder %v817, 16
      %vm838 = vcmp.ge.s32.totalorder %v818, 16
      %vm839 = vcmp.ge.s32.totalorder %v819, 16
      %vm840 = vcmp.ge.s32.totalorder %v820, 16
      %vm841 = vcmp.ge.s32.totalorder %v821, 16
      %vm842 = vcmp.ge.s32.totalorder %v822, 16
      %vm843 = vcmp.ge.s32.totalorder %v823, 16
      %vm844 = vcmp.ge.s32.totalorder %v824, 16
      %p845 = scmp.gt.s32.totalorder %s30, 0
      %s846 = scalar_select %p845, 1, 0
      %v847 = vstv %s846
      %vm848 = vcmp.eq.s32.totalorder %v847, 1
      %vm849 = vmor %vm825, %vm848
      %vm850 = vmor %vm826, %vm848
      %vm851 = vmor %vm827, %vm848
      %vm852 = vmor %vm828, %vm848
      %vm853 = vmor %vm829, %vm848
      %vm854 = vmor %vm830, %vm848
      %vm855 = vmor %vm831, %vm848
      %vm856 = vmor %vm832, %vm848
      %vm857 = vmor %vm833, %vm848
      %vm858 = vmor %vm834, %vm848
      %vm859 = vmor %vm835, %vm848
      %vm860 = vmor %vm836, %vm848
      %vm861 = vmor %vm837, %vm848
      %vm862 = vmor %vm838, %vm848
      %vm863 = vmor %vm839, %vm848
      %vm864 = vmor %vm840, %vm848
      %vm865 = vmor %vm841, %vm848
      %vm866 = vmor %vm842, %vm848
      %vm867 = vmor %vm843, %vm848
      %vm868 = vmor %vm844, %vm848
      %vm869 = vcmp.lt.s32.totalorder %v805, 144
      %vm870 = vcmp.lt.s32.totalorder %v806, 144
      %vm871 = vcmp.lt.s32.totalorder %v807, 144
      %vm872 = vcmp.lt.s32.totalorder %v808, 144
      %vm873 = vcmp.lt.s32.totalorder %v809, 144
      %vm874 = vcmp.lt.s32.totalorder %v810, 144
      %vm875 = vcmp.lt.s32.totalorder %v811, 144
      %vm876 = vcmp.lt.s32.totalorder %v812, 144
      %vm877 = vcmp.lt.s32.totalorder %v813, 144
      %vm878 = vcmp.lt.s32.totalorder %v814, 144
      %vm879 = vcmp.lt.s32.totalorder %v815, 144
      %vm880 = vcmp.lt.s32.totalorder %v816, 144
      %vm881 = vcmp.lt.s32.totalorder %v817, 144
      %vm882 = vcmp.lt.s32.totalorder %v818, 144
      %vm883 = vcmp.lt.s32.totalorder %v819, 144
      %vm884 = vcmp.lt.s32.totalorder %v820, 144
      %vm885 = vcmp.lt.s32.totalorder %v821, 144
      %vm886 = vcmp.lt.s32.totalorder %v822, 144
      %vm887 = vcmp.lt.s32.totalorder %v823, 144
      %vm888 = vcmp.lt.s32.totalorder %v824, 144
      %p889 = scmp.lt.s32.totalorder %s30, 1
      %s890 = scalar_select %p889, 1, 0
      %v891 = vstv %s890
      %vm892 = vcmp.eq.s32.totalorder %v891, 1
      %vm893 = vmor %vm869, %vm892
      %vm894 = vmor %vm870, %vm892
      %vm895 = vmor %vm871, %vm892
      %vm896 = vmor %vm872, %vm892
      %vm897 = vmor %vm873, %vm892
      %vm898 = vmor %vm874, %vm892
      %vm899 = vmor %vm875, %vm892
      %vm900 = vmor %vm876, %vm892
      %vm901 = vmor %vm877, %vm892
      %vm902 = vmor %vm878, %vm892
      %vm903 = vmor %vm879, %vm892
      %vm904 = vmor %vm880, %vm892
      %vm905 = vmor %vm881, %vm892
      %vm906 = vmor %vm882, %vm892
      %vm907 = vmor %vm883, %vm892
      %vm908 = vmor %vm884, %vm892
      %vm909 = vmor %vm885, %vm892
      %vm910 = vmor %vm886, %vm892
      %vm911 = vmor %vm887, %vm892
      %vm912 = vmor %vm888, %vm892
      %vm913 = vmand %vm849, %vm893
      %vm914 = vmand %vm850, %vm894
      %vm915 = vmand %vm851, %vm895
      %vm916 = vmand %vm852, %vm896
      %vm917 = vmand %vm853, %vm897
      %vm918 = vmand %vm854, %vm898
      %vm919 = vmand %vm855, %vm899
      %vm920 = vmand %vm856, %vm900
      %vm921 = vmand %vm857, %vm901
      %vm922 = vmand %vm858, %vm902
      %vm923 = vmand %vm859, %vm903
      %vm924 = vmand %vm860, %vm904
      %vm925 = vmand %vm861, %vm905
      %vm926 = vmand %vm862, %vm906
      %vm927 = vmand %vm863, %vm907
      %vm928 = vmand %vm864, %vm908
      %vm929 = vmand %vm865, %vm909
      %vm930 = vmand %vm866, %vm910
      %vm931 = vmand %vm867, %vm911
      %vm932 = vmand %vm868, %vm912
      %v933 = vsel %vm913, 1, 0
      %v934 = vsel %vm914, 1, 0
      %v935 = vsel %vm915, 1, 0
      %v936 = vsel %vm916, 1, 0
      %v937 = vsel %vm917, 1, 0
      %v938 = vsel %vm918, 1, 0
      %v939 = vsel %vm919, 1, 0
      %v940 = vsel %vm920, 1, 0
      %v941 = vsel %vm921, 1, 0
      %v942 = vsel %vm922, 1, 0
      %v943 = vsel %vm923, 1, 0
      %v944 = vsel %vm924, 1, 0
      %v945 = vsel %vm925, 1, 0
      %v946 = vsel %vm926, 1, 0
      %v947 = vsel %vm927, 1, 0
      %v948 = vsel %vm928, 1, 0
      %v949 = vsel %vm929, 1, 0
      %v950 = vsel %vm930, 1, 0
      %v951 = vsel %vm931, 1, 0
      %v952 = vsel %vm932, 1, 0
      %vm953 = vcmp.eq.s32.totalorder %v933, 1
      %vm954 = vcmp.eq.s32.totalorder %v934, 1
      %vm955 = vcmp.eq.s32.totalorder %v935, 1
      %vm956 = vcmp.eq.s32.totalorder %v936, 1
      %vm957 = vcmp.eq.s32.totalorder %v937, 1
      %vm958 = vcmp.eq.s32.totalorder %v938, 1
      %vm959 = vcmp.eq.s32.totalorder %v939, 1
      %vm960 = vcmp.eq.s32.totalorder %v940, 1
      %vm961 = vcmp.eq.s32.totalorder %v941, 1
      %vm962 = vcmp.eq.s32.totalorder %v942, 1
      %vm963 = vcmp.eq.s32.totalorder %v943, 1
      %vm964 = vcmp.eq.s32.totalorder %v944, 1
      %vm965 = vcmp.eq.s32.totalorder %v945, 1
      %vm966 = vcmp.eq.s32.totalorder %v946, 1
      %vm967 = vcmp.eq.s32.totalorder %v947, 1
      %vm968 = vcmp.eq.s32.totalorder %v948, 1
      %vm969 = vcmp.eq.s32.totalorder %v949, 1
      %vm970 = vcmp.eq.s32.totalorder %v950, 1
      %vm971 = vcmp.eq.s32.totalorder %v951, 1
      %vm972 = vcmp.eq.s32.totalorder %v952, 1
      %v973 = vsel %vm953, %v706, 0.0
      %v974 = vsel %vm954, %v711, 0.0
      %v975 = vsel %vm955, %v716, 0.0
      %v976 = vsel %vm956, %v721, 0.0
      %v977 = vsel %vm957, %v726, 0.0
      %v978 = vsel %vm958, %v731, 0.0
      %v979 = vsel %vm959, %v736, 0.0
      %v980 = vsel %vm960, %v741, 0.0
      %v981 = vsel %vm961, %v746, 0.0
      %v982 = vsel %vm962, %v751, 0.0
      %v983 = vsel %vm963, %v756, 0.0
      %v984 = vsel %vm964, %v761, 0.0
      %v985 = vsel %vm965, %v766, 0.0
      %v986 = vsel %vm966, %v771, 0.0
      %v987 = vsel %vm967, %v776, 0.0
      %v988 = vsel %vm968, %v781, 0.0
      %v989 = vsel %vm969, %v786, 0.0
      %v990 = vsel %vm970, %v791, 0.0
      %v991 = vsel %vm971, %v796, 0.0
      %v992 = vsel %vm972, %v801, 0.0
      %v993 = vld [vmem:[%s4] sm:$0x7]
      %v994 = vld [vmem:[%s4 + $0x4] sm:$0x7]
      %v995 = vld [vmem:[%s4 + $0x8] sm:$0x7]
      %v996 = vlaneseq
      %v997 = vshrl.u32 %v996, 7
      %v998 = vsub.s32 0, %v997
      %v999 = vrot.slane %v993, %v998
      %v1000 = vmul.f32 %v999, %v973
      %v1001 = vmul.f32 %v999, %v974
      %v1002 = vmul.f32 %v999, %v975
      %v1003 = vmul.f32 %v999, %v976
      %v1004 = vmul.f32 %v999, %v977
      %v1005 = vmul.f32 %v999, %v978
      %v1006 = vmul.f32 %v999, %v979
      %v1007 = vmul.f32 %v999, %v980
      %v1008 = vmul.f32 %v999, %v981
      %v1009 = vmul.f32 %v999, %v982
      %v1010 = vmul.f32 %v999, %v983
      %v1011 = vmul.f32 %v999, %v984
      %v1012 = vmul.f32 %v999, %v985
      %v1013 = vmul.f32 %v999, %v986
      %v1014 = vmul.f32 %v999, %v987
      %v1015 = vmul.f32 %v999, %v988
      %v1016 = vlaneseq
      %v1017 = vshrl.u32 %v1016, 7
      %v1018 = vsub.s32 0, %v1017
      %v1019 = vrot.slane %v994, %v1018
      %v1020 = vmul.f32 %v1019, %v975
      %v1021 = vmul.f32 %v1019, %v976
      %v1022 = vmul.f32 %v1019, %v977
      %v1023 = vmul.f32 %v1019, %v978
      %v1024 = vmul.f32 %v1019, %v979
      %v1025 = vmul.f32 %v1019, %v980
      %v1026 = vmul.f32 %v1019, %v981
      %v1027 = vmul.f32 %v1019, %v982
      %v1028 = vmul.f32 %v1019, %v983
      %v1029 = vmul.f32 %v1019, %v984
      %v1030 = vmul.f32 %v1019, %v985
      %v1031 = vmul.f32 %v1019, %v986
      %v1032 = vmul.f32 %v1019, %v987
      %v1033 = vmul.f32 %v1019, %v988
      %v1034 = vmul.f32 %v1019, %v989
      %v1035 = vmul.f32 %v1019, %v990
      %v1036 = vadd.f32 %v1000, %v1020
      %v1037 = vadd.f32 %v1001, %v1021
      %v1038 = vadd.f32 %v1002, %v1022
      %v1039 = vadd.f32 %v1003, %v1023
      %v1040 = vadd.f32 %v1004, %v1024
      %v1041 = vadd.f32 %v1005, %v1025
      %v1042 = vadd.f32 %v1006, %v1026
      %v1043 = vadd.f32 %v1007, %v1027
      %v1044 = vadd.f32 %v1008, %v1028
      %v1045 = vadd.f32 %v1009, %v1029
      %v1046 = vadd.f32 %v1010, %v1030
      %v1047 = vadd.f32 %v1011, %v1031
      %v1048 = vadd.f32 %v1012, %v1032
      %v1049 = vadd.f32 %v1013, %v1033
      %v1050 = vadd.f32 %v1014, %v1034
      %v1051 = vadd.f32 %v1015, %v1035
      %v1052 = vlaneseq
      %v1053 = vshrl.u32 %v1052, 7
      %v1054 = vsub.s32 0, %v1053
      %v1055 = vrot.slane %v995, %v1054
      %v1056 = vmul.f32 %v1055, %v977
      %v1057 = vmul.f32 %v1055, %v978
      %v1058 = vmul.f32 %v1055, %v979
      %v1059 = vmul.f32 %v1055, %v980
      %v1060 = vmul.f32 %v1055, %v981
      %v1061 = vmul.f32 %v1055, %v982
      %v1062 = vmul.f32 %v1055, %v983
      %v1063 = vmul.f32 %v1055, %v984
      %v1064 = vmul.f32 %v1055, %v985
      %v1065 = vmul.f32 %v1055, %v986
      %v1066 = vmul.f32 %v1055, %v987
      %v1067 = vmul.f32 %v1055, %v988
      %v1068 = vmul.f32 %v1055, %v989
      %v1069 = vmul.f32 %v1055, %v990
      %v1070 = vmul.f32 %v1055, %v991
      %v1071 = vmul.f32 %v1055, %v992
      %v1072 = vadd.f32 %v1036, %v1056
      %v1073 = vadd.f32 %v1037, %v1057
      %v1074 = vadd.f32 %v1038, %v1058
      %v1075 = vadd.f32 %v1039, %v1059
      %v1076 = vadd.f32 %v1040, %v1060
      %v1077 = vadd.f32 %v1041, %v1061
      %v1078 = vadd.f32 %v1042, %v1062
      %v1079 = vadd.f32 %v1043, %v1063
      %v1080 = vadd.f32 %v1044, %v1064
      %v1081 = vadd.f32 %v1045, %v1065
      %v1082 = vadd.f32 %v1046, %v1066
      %v1083 = vadd.f32 %v1047, %v1067
      %v1084 = vadd.f32 %v1048, %v1068
      %v1085 = vadd.f32 %v1049, %v1069
      %v1086 = vadd.f32 %v1050, %v1070
      %v1087 = vadd.f32 %v1051, %v1071
      %v1088 = vlaneseq
      %v1089 = vshrl.u32 %v1088, 7
      %v1090 = vsub.s32 1, %v1089
      %v1091 = vrot.slane %v993, %v1090
      %v1092 = vmul.f32 %v1091, %v973
      %v1093 = vmul.f32 %v1091, %v974
      %v1094 = vmul.f32 %v1091, %v975
      %v1095 = vmul.f32 %v1091, %v976
      %v1096 = vmul.f32 %v1091, %v977
      %v1097 = vmul.f32 %v1091, %v978
      %v1098 = vmul.f32 %v1091, %v979
      %v1099 = vmul.f32 %v1091, %v980
      %v1100 = vmul.f32 %v1091, %v981
      %v1101 = vmul.f32 %v1091, %v982
      %v1102 = vmul.f32 %v1091, %v983
      %v1103 = vmul.f32 %v1091, %v984
      %v1104 = vmul.f32 %v1091, %v985
      %v1105 = vmul.f32 %v1091, %v986
      %v1106 = vmul.f32 %v1091, %v987
      %v1107 = vmul.f32 %v1091, %v988
      %v1108 = vlaneseq
      %v1109 = vshrl.u32 %v1108, 7
      %v1110 = vsub.s32 1, %v1109
      %v1111 = vrot.slane %v994, %v1110
      %v1112 = vmul.f32 %v1111, %v975
      %v1113 = vmul.f32 %v1111, %v976
      %v1114 = vmul.f32 %v1111, %v977
      %v1115 = vmul.f32 %v1111, %v978
      %v1116 = vmul.f32 %v1111, %v979
      %v1117 = vmul.f32 %v1111, %v980
      %v1118 = vmul.f32 %v1111, %v981
      %v1119 = vmul.f32 %v1111, %v982
      %v1120 = vmul.f32 %v1111, %v983
      %v1121 = vmul.f32 %v1111, %v984
      %v1122 = vmul.f32 %v1111, %v985
      %v1123 = vmul.f32 %v1111, %v986
      %v1124 = vmul.f32 %v1111, %v987
      %v1125 = vmul.f32 %v1111, %v988
      %v1126 = vmul.f32 %v1111, %v989
      %v1127 = vmul.f32 %v1111, %v990
      %v1128 = vadd.f32 %v1092, %v1112
      %v1129 = vadd.f32 %v1093, %v1113
      %v1130 = vadd.f32 %v1094, %v1114
      %v1131 = vadd.f32 %v1095, %v1115
      %v1132 = vadd.f32 %v1096, %v1116
      %v1133 = vadd.f32 %v1097, %v1117
      %v1134 = vadd.f32 %v1098, %v1118
      %v1135 = vadd.f32 %v1099, %v1119
      %v1136 = vadd.f32 %v1100, %v1120
      %v1137 = vadd.f32 %v1101, %v1121
      %v1138 = vadd.f32 %v1102, %v1122
      %v1139 = vadd.f32 %v1103, %v1123
      %v1140 = vadd.f32 %v1104, %v1124
      %v1141 = vadd.f32 %v1105, %v1125
      %v1142 = vadd.f32 %v1106, %v1126
      %v1143 = vadd.f32 %v1107, %v1127
      %v1144 = vlaneseq
      %v1145 = vshrl.u32 %v1144, 7
      %v1146 = vsub.s32 1, %v1145
      %v1147 = vrot.slane %v995, %v1146
      %v1148 = vmul.f32 %v1147, %v977
      %v1149 = vmul.f32 %v1147, %v978
      %v1150 = vmul.f32 %v1147, %v979
      %v1151 = vmul.f32 %v1147, %v980
      %v1152 = vmul.f32 %v1147, %v981
      %v1153 = vmul.f32 %v1147, %v982
      %v1154 = vmul.f32 %v1147, %v983
      %v1155 = vmul.f32 %v1147, %v984
      %v1156 = vmul.f32 %v1147, %v985
      %v1157 = vmul.f32 %v1147, %v986
      %v1158 = vmul.f32 %v1147, %v987
      %v1159 = vmul.f32 %v1147, %v988
      %v1160 = vmul.f32 %v1147, %v989
      %v1161 = vmul.f32 %v1147, %v990
      %v1162 = vmul.f32 %v1147, %v991
      %v1163 = vmul.f32 %v1147, %v992
      %v1164 = vadd.f32 %v1128, %v1148
      %v1165 = vadd.f32 %v1129, %v1149
      %v1166 = vadd.f32 %v1130, %v1150
      %v1167 = vadd.f32 %v1131, %v1151
      %v1168 = vadd.f32 %v1132, %v1152
      %v1169 = vadd.f32 %v1133, %v1153
      %v1170 = vadd.f32 %v1134, %v1154
      %v1171 = vadd.f32 %v1135, %v1155
      %v1172 = vadd.f32 %v1136, %v1156
      %v1173 = vadd.f32 %v1137, %v1157
      %v1174 = vadd.f32 %v1138, %v1158
      %v1175 = vadd.f32 %v1139, %v1159
      %v1176 = vadd.f32 %v1140, %v1160
      %v1177 = vadd.f32 %v1141, %v1161
      %v1178 = vadd.f32 %v1142, %v1162
      %v1179 = vadd.f32 %v1143, %v1163
      %v1180 = vlaneseq
      %v1181 = vshrl.u32 %v1180, 7
      %v1182 = vsub.s32 2, %v1181
      %v1183 = vrot.slane %v993, %v1182
      %v1184 = vmul.f32 %v1183, %v973
      %v1185 = vmul.f32 %v1183, %v974
      %v1186 = vmul.f32 %v1183, %v975
      %v1187 = vmul.f32 %v1183, %v976
      %v1188 = vmul.f32 %v1183, %v977
      %v1189 = vmul.f32 %v1183, %v978
      %v1190 = vmul.f32 %v1183, %v979
      %v1191 = vmul.f32 %v1183, %v980
      %v1192 = vmul.f32 %v1183, %v981
      %v1193 = vmul.f32 %v1183, %v982
      %v1194 = vmul.f32 %v1183, %v983
      %v1195 = vmul.f32 %v1183, %v984
      %v1196 = vmul.f32 %v1183, %v985
      %v1197 = vmul.f32 %v1183, %v986
      %v1198 = vmul.f32 %v1183, %v987
      %v1199 = vmul.f32 %v1183, %v988
      %v1200 = vlaneseq
      %v1201 = vshrl.u32 %v1200, 7
      %v1202 = vsub.s32 2, %v1201
      %v1203 = vrot.slane %v994, %v1202
      %v1204 = vmul.f32 %v1203, %v975
      %v1205 = vmul.f32 %v1203, %v976
      %v1206 = vmul.f32 %v1203, %v977
      %v1207 = vmul.f32 %v1203, %v978
      %v1208 = vmul.f32 %v1203, %v979
      %v1209 = vmul.f32 %v1203, %v980
      %v1210 = vmul.f32 %v1203, %v981
      %v1211 = vmul.f32 %v1203, %v982
      %v1212 = vmul.f32 %v1203, %v983
      %v1213 = vmul.f32 %v1203, %v984
      %v1214 = vmul.f32 %v1203, %v985
      %v1215 = vmul.f32 %v1203, %v986
      %v1216 = vmul.f32 %v1203, %v987
      %v1217 = vmul.f32 %v1203, %v988
      %v1218 = vmul.f32 %v1203, %v989
      %v1219 = vmul.f32 %v1203, %v990
      %v1220 = vadd.f32 %v1184, %v1204
      %v1221 = vadd.f32 %v1185, %v1205
      %v1222 = vadd.f32 %v1186, %v1206
      %v1223 = vadd.f32 %v1187, %v1207
      %v1224 = vadd.f32 %v1188, %v1208
      %v1225 = vadd.f32 %v1189, %v1209
      %v1226 = vadd.f32 %v1190, %v1210
      %v1227 = vadd.f32 %v1191, %v1211
      %v1228 = vadd.f32 %v1192, %v1212
      %v1229 = vadd.f32 %v1193, %v1213
      %v1230 = vadd.f32 %v1194, %v1214
      %v1231 = vadd.f32 %v1195, %v1215
      %v1232 = vadd.f32 %v1196, %v1216
      %v1233 = vadd.f32 %v1197, %v1217
      %v1234 = vadd.f32 %v1198, %v1218
      %v1235 = vadd.f32 %v1199, %v1219
      %v1236 = vlaneseq
      %v1237 = vshrl.u32 %v1236, 7
      %v1238 = vsub.s32 2, %v1237
      %v1239 = vrot.slane %v995, %v1238
      %v1240 = vmul.f32 %v1239, %v977
      %v1241 = vmul.f32 %v1239, %v978
      %v1242 = vmul.f32 %v1239, %v979
      %v1243 = vmul.f32 %v1239, %v980
      %v1244 = vmul.f32 %v1239, %v981
      %v1245 = vmul.f32 %v1239, %v982
      %v1246 = vmul.f32 %v1239, %v983
      %v1247 = vmul.f32 %v1239, %v984
      %v1248 = vmul.f32 %v1239, %v985
      %v1249 = vmul.f32 %v1239, %v986
      %v1250 = vmul.f32 %v1239, %v987
      %v1251 = vmul.f32 %v1239, %v988
      %v1252 = vmul.f32 %v1239, %v989
      %v1253 = vmul.f32 %v1239, %v990
      %v1254 = vmul.f32 %v1239, %v991
      %v1255 = vmul.f32 %v1239, %v992
      %v1256 = vadd.f32 %v1220, %v1240
      %v1257 = vadd.f32 %v1221, %v1241
      %v1258 = vadd.f32 %v1222, %v1242
      %v1259 = vadd.f32 %v1223, %v1243
      %v1260 = vadd.f32 %v1224, %v1244
      %v1261 = vadd.f32 %v1225, %v1245
      %v1262 = vadd.f32 %v1226, %v1246
      %v1263 = vadd.f32 %v1227, %v1247
      %v1264 = vadd.f32 %v1228, %v1248
      %v1265 = vadd.f32 %v1229, %v1249
      %v1266 = vadd.f32 %v1230, %v1250
      %v1267 = vadd.f32 %v1231, %v1251
      %v1268 = vadd.f32 %v1232, %v1252
      %v1269 = vadd.f32 %v1233, %v1253
      %v1270 = vadd.f32 %v1234, %v1254
      %v1271 = vadd.f32 %v1235, %v1255
      %v1272 = vand.u32 %v805, 15
      %v1273 = vand.u32 %v806, 15
      %v1274 = vand.u32 %v807, 15
      %v1275 = vand.u32 %v808, 15
      %v1276 = vand.u32 %v809, 15
      %v1277 = vand.u32 %v810, 15
      %v1278 = vand.u32 %v811, 15
      %v1279 = vand.u32 %v812, 15
      %v1280 = vand.u32 %v813, 15
      %v1281 = vand.u32 %v814, 15
      %v1282 = vand.u32 %v815, 15
      %v1283 = vand.u32 %v816, 15
      %v1284 = vand.u32 %v817, 15
      %v1285 = vand.u32 %v818, 15
      %v1286 = vand.u32 %v819, 15
      %v1287 = vand.u32 %v820, 15
      %vm1288 = vcmp.gt.s32.totalorder %v1272, 0
      %vm1289 = vcmp.gt.s32.totalorder %v1273, 0
      %vm1290 = vcmp.gt.s32.totalorder %v1274, 0
      %vm1291 = vcmp.gt.s32.totalorder %v1275, 0
      %vm1292 = vcmp.gt.s32.totalorder %v1276, 0
      %vm1293 = vcmp.gt.s32.totalorder %v1277, 0
      %vm1294 = vcmp.gt.s32.totalorder %v1278, 0
      %vm1295 = vcmp.gt.s32.totalorder %v1279, 0
      %vm1296 = vcmp.gt.s32.totalorder %v1280, 0
      %vm1297 = vcmp.gt.s32.totalorder %v1281, 0
      %vm1298 = vcmp.gt.s32.totalorder %v1282, 0
      %vm1299 = vcmp.gt.s32.totalorder %v1283, 0
      %vm1300 = vcmp.gt.s32.totalorder %v1284, 0
      %vm1301 = vcmp.gt.s32.totalorder %v1285, 0
      %vm1302 = vcmp.gt.s32.totalorder %v1286, 0
      %vm1303 = vcmp.gt.s32.totalorder %v1287, 0
      %v1304 = vrot.slane %v1072, 7
      %v1305 = vrot.slane %v1073, 7
      %v1306 = vrot.slane %v1074, 7
      %v1307 = vrot.slane %v1075, 7
      %v1308 = vrot.slane %v1076, 7
      %v1309 = vrot.slane %v1077, 7
      %v1310 = vrot.slane %v1078, 7
      %v1311 = vrot.slane %v1079, 7
      %v1312 = vrot.slane %v1080, 7
      %v1313 = vrot.slane %v1081, 7
      %v1314 = vrot.slane %v1082, 7
      %v1315 = vrot.slane %v1083, 7
      %v1316 = vrot.slane %v1084, 7
      %v1317 = vrot.slane %v1085, 7
      %v1318 = vrot.slane %v1086, 7
      %v1319 = vrot.slane %v1087, 7
      %vm1320 = vcmp.lt.s32.totalorder %v805, 1
      %v1321 = vsel %vm1320, %v1318, %v1319
      %v1322 = vsel %vm1320, %v1317, %v1318
      %v1323 = vsel %vm1320, %v1316, %v1317
      %v1324 = vsel %vm1320, %v1315, %v1316
      %v1325 = vsel %vm1320, %v1314, %v1315
      %v1326 = vsel %vm1320, %v1313, %v1314
      %v1327 = vsel %vm1320, %v1312, %v1313
      %v1328 = vsel %vm1320, %v1311, %v1312
      %v1329 = vsel %vm1320, %v1310, %v1311
      %v1330 = vsel %vm1320, %v1309, %v1310
      %v1331 = vsel %vm1320, %v1308, %v1309
      %v1332 = vsel %vm1320, %v1307, %v1308
      %v1333 = vsel %vm1320, %v1306, %v1307
      %v1334 = vsel %vm1320, %v1305, %v1306
      %v1335 = vsel %vm1320, %v1304, %v1305
      %v1336 = vsel %vm1320, %v1319, %v1304
      %v1337 = vsel %vm1288, 1, 0
      %v1338 = vsel %vm1289, 1, 0
      %v1339 = vsel %vm1290, 1, 0
      %v1340 = vsel %vm1291, 1, 0
      %v1341 = vsel %vm1292, 1, 0
      %v1342 = vsel %vm1293, 1, 0
      %v1343 = vsel %vm1294, 1, 0
      %v1344 = vsel %vm1295, 1, 0
      %v1345 = vsel %vm1296, 1, 0
      %v1346 = vsel %vm1297, 1, 0
      %v1347 = vsel %vm1298, 1, 0
      %v1348 = vsel %vm1299, 1, 0
      %v1349 = vsel %vm1300, 1, 0
      %v1350 = vsel %vm1301, 1, 0
      %v1351 = vsel %vm1302, 1, 0
      %v1352 = vsel %vm1303, 1, 0
      %vm1353 = vcmp.eq.s32.totalorder %v1337, 1
      %vm1354 = vcmp.eq.s32.totalorder %v1338, 1
      %vm1355 = vcmp.eq.s32.totalorder %v1339, 1
      %vm1356 = vcmp.eq.s32.totalorder %v1340, 1
      %vm1357 = vcmp.eq.s32.totalorder %v1341, 1
      %vm1358 = vcmp.eq.s32.totalorder %v1342, 1
      %vm1359 = vcmp.eq.s32.totalorder %v1343, 1
      %vm1360 = vcmp.eq.s32.totalorder %v1344, 1
      %vm1361 = vcmp.eq.s32.totalorder %v1345, 1
      %vm1362 = vcmp.eq.s32.totalorder %v1346, 1
      %vm1363 = vcmp.eq.s32.totalorder %v1347, 1
      %vm1364 = vcmp.eq.s32.totalorder %v1348, 1
      %vm1365 = vcmp.eq.s32.totalorder %v1349, 1
      %vm1366 = vcmp.eq.s32.totalorder %v1350, 1
      %vm1367 = vcmp.eq.s32.totalorder %v1351, 1
      %vm1368 = vcmp.eq.s32.totalorder %v1352, 1
      %v1369 = vsel %vm1353, %v1336, 0.0
      %v1370 = vsel %vm1354, %v1335, 0.0
      %v1371 = vsel %vm1355, %v1334, 0.0
      %v1372 = vsel %vm1356, %v1333, 0.0
      %v1373 = vsel %vm1357, %v1332, 0.0
      %v1374 = vsel %vm1358, %v1331, 0.0
      %v1375 = vsel %vm1359, %v1330, 0.0
      %v1376 = vsel %vm1360, %v1329, 0.0
      %v1377 = vsel %vm1361, %v1328, 0.0
      %v1378 = vsel %vm1362, %v1327, 0.0
      %v1379 = vsel %vm1363, %v1326, 0.0
      %v1380 = vsel %vm1364, %v1325, 0.0
      %v1381 = vsel %vm1365, %v1324, 0.0
      %v1382 = vsel %vm1366, %v1323, 0.0
      %v1383 = vsel %vm1367, %v1322, 0.0
      %v1384 = vsel %vm1368, %v1321, 0.0
      %vm1385 = vcmp.lt.s32.totalorder %v1272, 15
      %vm1386 = vcmp.lt.s32.totalorder %v1273, 15
      %vm1387 = vcmp.lt.s32.totalorder %v1274, 15
      %vm1388 = vcmp.lt.s32.totalorder %v1275, 15
      %vm1389 = vcmp.lt.s32.totalorder %v1276, 15
      %vm1390 = vcmp.lt.s32.totalorder %v1277, 15
      %vm1391 = vcmp.lt.s32.totalorder %v1278, 15
      %vm1392 = vcmp.lt.s32.totalorder %v1279, 15
      %vm1393 = vcmp.lt.s32.totalorder %v1280, 15
      %vm1394 = vcmp.lt.s32.totalorder %v1281, 15
      %vm1395 = vcmp.lt.s32.totalorder %v1282, 15
      %vm1396 = vcmp.lt.s32.totalorder %v1283, 15
      %vm1397 = vcmp.lt.s32.totalorder %v1284, 15
      %vm1398 = vcmp.lt.s32.totalorder %v1285, 15
      %vm1399 = vcmp.lt.s32.totalorder %v1286, 15
      %vm1400 = vcmp.lt.s32.totalorder %v1287, 15
      %v1401 = vrot.slane %v1256, 1
      %v1402 = vrot.slane %v1257, 1
      %v1403 = vrot.slane %v1258, 1
      %v1404 = vrot.slane %v1259, 1
      %v1405 = vrot.slane %v1260, 1
      %v1406 = vrot.slane %v1261, 1
      %v1407 = vrot.slane %v1262, 1
      %v1408 = vrot.slane %v1263, 1
      %v1409 = vrot.slane %v1264, 1
      %v1410 = vrot.slane %v1265, 1
      %v1411 = vrot.slane %v1266, 1
      %v1412 = vrot.slane %v1267, 1
      %v1413 = vrot.slane %v1268, 1
      %v1414 = vrot.slane %v1269, 1
      %v1415 = vrot.slane %v1270, 1
      %v1416 = vrot.slane %v1271, 1
      %vm1417 = vcmp.lt.s32.totalorder %v805, 7
      %v1418 = vsel %vm1417, %v1415, %v1416
      %v1419 = vsel %vm1417, %v1414, %v1415
      %v1420 = vsel %vm1417, %v1413, %v1414
      %v1421 = vsel %vm1417, %v1412, %v1413
      %v1422 = vsel %vm1417, %v1411, %v1412
      %v1423 = vsel %vm1417, %v1410, %v1411
      %v1424 = vsel %vm1417, %v1409, %v1410
      %v1425 = vsel %vm1417, %v1408, %v1409
      %v1426 = vsel %vm1417, %v1407, %v1408
      %v1427 = vsel %vm1417, %v1406, %v1407
      %v1428 = vsel %vm1417, %v1405, %v1406
      %v1429 = vsel %vm1417, %v1404, %v1405
      %v1430 = vsel %vm1417, %v1403, %v1404
      %v1431 = vsel %vm1417, %v1402, %v1403
      %v1432 = vsel %vm1417, %v1401, %v1402
      %v1433 = vsel %vm1417, %v1416, %v1401
      %v1434 = vsel %vm1385, 1, 0
      %v1435 = vsel %vm1386, 1, 0
      %v1436 = vsel %vm1387, 1, 0
      %v1437 = vsel %vm1388, 1, 0
      %v1438 = vsel %vm1389, 1, 0
      %v1439 = vsel %vm1390, 1, 0
      %v1440 = vsel %vm1391, 1, 0
      %v1441 = vsel %vm1392, 1, 0
      %v1442 = vsel %vm1393, 1, 0
      %v1443 = vsel %vm1394, 1, 0
      %v1444 = vsel %vm1395, 1, 0
      %v1445 = vsel %vm1396, 1, 0
      %v1446 = vsel %vm1397, 1, 0
      %v1447 = vsel %vm1398, 1, 0
      %v1448 = vsel %vm1399, 1, 0
      %v1449 = vsel %vm1400, 1, 0
      %vm1450 = vcmp.eq.s32.totalorder %v1434, 1
      %vm1451 = vcmp.eq.s32.totalorder %v1435, 1
      %vm1452 = vcmp.eq.s32.totalorder %v1436, 1
      %vm1453 = vcmp.eq.s32.totalorder %v1437, 1
      %vm1454 = vcmp.eq.s32.totalorder %v1438, 1
      %vm1455 = vcmp.eq.s32.totalorder %v1439, 1
      %vm1456 = vcmp.eq.s32.totalorder %v1440, 1
      %vm1457 = vcmp.eq.s32.totalorder %v1441, 1
      %vm1458 = vcmp.eq.s32.totalorder %v1442, 1
      %vm1459 = vcmp.eq.s32.totalorder %v1443, 1
      %vm1460 = vcmp.eq.s32.totalorder %v1444, 1
      %vm1461 = vcmp.eq.s32.totalorder %v1445, 1
      %vm1462 = vcmp.eq.s32.totalorder %v1446, 1
      %vm1463 = vcmp.eq.s32.totalorder %v1447, 1
      %vm1464 = vcmp.eq.s32.totalorder %v1448, 1
      %vm1465 = vcmp.eq.s32.totalorder %v1449, 1
      %v1466 = vsel %vm1450, %v1432, 0.0
      %v1467 = vsel %vm1451, %v1431, 0.0
      %v1468 = vsel %vm1452, %v1430, 0.0
      %v1469 = vsel %vm1453, %v1429, 0.0
      %v1470 = vsel %vm1454, %v1428, 0.0
      %v1471 = vsel %vm1455, %v1427, 0.0
      %v1472 = vsel %vm1456, %v1426, 0.0
      %v1473 = vsel %vm1457, %v1425, 0.0
      %v1474 = vsel %vm1458, %v1424, 0.0
      %v1475 = vsel %vm1459, %v1423, 0.0
      %v1476 = vsel %vm1460, %v1422, 0.0
      %v1477 = vsel %vm1461, %v1421, 0.0
      %v1478 = vsel %vm1462, %v1420, 0.0
      %v1479 = vsel %vm1463, %v1419, 0.0
      %v1480 = vsel %vm1464, %v1418, 0.0
      %v1481 = vsel %vm1465, %v1433, 0.0
      %v1482 = vadd.f32 %v1164, %v1369
      %v1483 = vadd.f32 %v1165, %v1370
      %v1484 = vadd.f32 %v1166, %v1371
      %v1485 = vadd.f32 %v1167, %v1372
      %v1486 = vadd.f32 %v1168, %v1373
      %v1487 = vadd.f32 %v1169, %v1374
      %v1488 = vadd.f32 %v1170, %v1375
      %v1489 = vadd.f32 %v1171, %v1376
      %v1490 = vadd.f32 %v1172, %v1377
      %v1491 = vadd.f32 %v1173, %v1378
      %v1492 = vadd.f32 %v1174, %v1379
      %v1493 = vadd.f32 %v1175, %v1380
      %v1494 = vadd.f32 %v1176, %v1381
      %v1495 = vadd.f32 %v1177, %v1382
      %v1496 = vadd.f32 %v1178, %v1383
      %v1497 = vadd.f32 %v1179, %v1384
      %v1498 = vadd.f32 %v1482, %v1466
      %v1499 = vadd.f32 %v1483, %v1467
      %v1500 = vadd.f32 %v1484, %v1468
      %v1501 = vadd.f32 %v1485, %v1469
      %v1502 = vadd.f32 %v1486, %v1470
      %v1503 = vadd.f32 %v1487, %v1471
      %v1504 = vadd.f32 %v1488, %v1472
      %v1505 = vadd.f32 %v1489, %v1473
      %v1506 = vadd.f32 %v1490, %v1474
      %v1507 = vadd.f32 %v1491, %v1475
      %v1508 = vadd.f32 %v1492, %v1476
      %v1509 = vadd.f32 %v1493, %v1477
      %v1510 = vadd.f32 %v1494, %v1478
      %v1511 = vadd.f32 %v1495, %v1479
      %v1512 = vadd.f32 %v1496, %v1480
      %v1513 = vadd.f32 %v1497, %v1481
      %v1514 = vld [vmem:[%s5] sm:$0x1]
      %v1516 = vlaneseq
      %v1517 = vshrl.u32 %v1516, 7
      %v1518 = vsub.s32 0, %v1517
      %v1519 = vrot.slane %v1514, %v1518
      %v1521 = vadd.f32 %v1498, %v1519
      %v1522 = vadd.f32 %v1499, %v1519
      %v1523 = vadd.f32 %v1500, %v1519
      %v1524 = vadd.f32 %v1501, %v1519
      %v1525 = vadd.f32 %v1502, %v1519
      %v1526 = vadd.f32 %v1503, %v1519
      %v1527 = vadd.f32 %v1504, %v1519
      %v1528 = vadd.f32 %v1505, %v1519
      %v1529 = vadd.f32 %v1506, %v1519
      %v1530 = vadd.f32 %v1507, %v1519
      %v1531 = vadd.f32 %v1508, %v1519
      %v1532 = vadd.f32 %v1509, %v1519
      %v1533 = vadd.f32 %v1510, %v1519
      %v1534 = vadd.f32 %v1511, %v1519
      %v1535 = vadd.f32 %v1512, %v1519
      %v1536 = vadd.f32 %v1513, %v1519
      %1553 = vrot.lane.b32.xlu0 %v1521, 124
      %v1554 = vpop.permute.xlu0 %1553
      %1555 = vrot.lane.b32.xlu0 %v1522, 124
      %v1556 = vpop.permute.xlu0 %1555
      %1557 = vrot.lane.b32.xlu0 %v1523, 124
      %v1558 = vpop.permute.xlu0 %1557
      %1559 = vrot.lane.b32.xlu0 %v1524, 124
      %v1560 = vpop.permute.xlu0 %1559
      %1561 = vrot.lane.b32.xlu0 %v1525, 124
      %v1562 = vpop.permute.xlu0 %1561
      %1563 = vrot.lane.b32.xlu0 %v1526, 124
      %v1564 = vpop.permute.xlu0 %1563
      %1565 = vrot.lane.b32.xlu0 %v1527, 124
      %v1566 = vpop.permute.xlu0 %1565
      %1567 = vrot.lane.b32.xlu0 %v1528, 124
      %v1568 = vpop.permute.xlu0 %1567
      %1569 = vrot.lane.b32.xlu0 %v1529, 124
      %v1570 = vpop.permute.xlu0 %1569
      %1571 = vrot.lane.b32.xlu0 %v1530, 124
      %v1572 = vpop.permute.xlu0 %1571
      %1573 = vrot.lane.b32.xlu0 %v1531, 124
      %v1574 = vpop.permute.xlu0 %1573
      %1575 = vrot.lane.b32.xlu0 %v1532, 124
      %v1576 = vpop.permute.xlu0 %1575
      %1577 = vrot.lane.b32.xlu0 %v1533, 124
      %v1578 = vpop.permute.xlu0 %1577
      %1579 = vrot.lane.b32.xlu0 %v1534, 124
      %v1580 = vpop.permute.xlu0 %1579
      %1581 = vrot.lane.b32.xlu0 %v1535, 124
      %v1582 = vpop.permute.xlu0 %1581
      %1583 = vrot.lane.b32.xlu0 %v1536, 124
      %v1584 = vpop.permute.xlu0 %1583
      %v1601 = vmul.f32 %v1521, %v1554
      %v1602 = vmul.f32 %v1522, %v1556
      %v1603 = vmul.f32 %v1523, %v1558
      %v1604 = vmul.f32 %v1524, %v1560
      %v1605 = vmul.f32 %v1525, %v1562
      %v1606 = vmul.f32 %v1526, %v1564
      %v1607 = vmul.f32 %v1527, %v1566
      %v1608 = vmul.f32 %v1528, %v1568
      %v1609 = vmul.f32 %v1529, %v1570
      %v1610 = vmul.f32 %v1530, %v1572
      %v1611 = vmul.f32 %v1531, %v1574
      %v1612 = vmul.f32 %v1532, %v1576
      %v1613 = vmul.f32 %v1533, %v1578
      %v1614 = vmul.f32 %v1534, %v1580
      %v1615 = vmul.f32 %v1535, %v1582
      %v1616 = vmul.f32 %v1536, %v1584
      %v1617 = vld [vmem:[%s6] sm:$0xf]
      %v1618 = vld [vmem:[%s7] sm:$0x1]
      %v1620 = vlaneseq
      %v1621 = vshrl.u32 %v1620, 7
      %v1622 = vsub.s32 0, %v1621
      %v1623 = vrot.slane %v1618, %v1622
      %v1626 = vsel %vm574, %v1601, 0
      %v1629 = vsel %vm574, %v1602, 0
      %v1632 = vsel %vm574, %v1603, 0
      %v1635 = vsel %vm574, %v1604, 0
      %v1638 = vsel %vm574, %v1605, 0
      %v1641 = vsel %vm574, %v1606, 0
      %v1644 = vsel %vm574, %v1607, 0
      %v1647 = vsel %vm574, %v1608, 0
      %v1650 = vsel %vm574, %v1609, 0
      %v1653 = vsel %vm574, %v1610, 0
      %v1656 = vsel %vm574, %v1611, 0
      %v1659 = vsel %vm574, %v1612, 0
      %v1662 = vsel %vm574, %v1613, 0
      %v1665 = vsel %vm574, %v1614, 0
      %v1668 = vsel %vm574, %v1615, 0
      %v1671 = vsel %vm574, %v1616, 0
      %v1674 = vsel %vm635, %v1617, 0
      %1676 = vmatprep.subr.mxu0 0.0
      %1677 = vmatpush1.msra.mxu0 %v1674
      %1678 = vmatprep.subr.mxu0 0.0
      %1679 = vmatpush1.msra.mxu0 0.0
      %1680 = vmatprep.subr.mxu0 0.0
      %1681 = vmatpush1.msra.mxu0 0.0
      %1682 = vmatprep.subr.mxu0 0.0
      %1683 = vmatpush1.msra.mxu0 0.0
      %1684 = vmatprep.subr.mxu0 0.0
      %1685 = vmatpush1.msra.mxu0 0.0
      %1686 = vmatprep.subr.mxu0 0.0
      %1687 = vmatpush1.msra.mxu0 0.0
      %1688 = vmatprep.subr.mxu0 0.0
      %1689 = vmatpush1.msra.mxu0 0.0
      %1690 = vmatprep.subr.mxu0 0.0
      %1691 = vmatpush1.msra.mxu0 0.0
      %1692 = vmatprep.subr.mxu0 0.0
      %1693 = vmatpush1.msra.mxu0 0.0
      %1694 = vmatprep.subr.mxu0 0.0
      %1695 = vmatpush1.msra.mxu0 0.0
      %1696 = vmatprep.subr.mxu0 0.0
      %1697 = vmatpush1.msra.mxu0 0.0
      %1698 = vmatprep.subr.mxu0 0.0
      %1699 = vmatpush1.msra.mxu0 0.0
      %1700 = vmatprep.subr.mxu0 0.0
      %1701 = vmatpush1.msra.mxu0 0.0
      %1702 = vmatprep.subr.mxu0 0.0
      %1703 = vmatpush1.msra.mxu0 0.0
      %1704 = vmatprep.subr.mxu0 0.0
      %1705 = vmatpush1.msra.mxu0 0.0
      %1706 = vmatprep.subr.mxu0 0.0
      %1707 = vmatpush1.msra.mxu0 0.0
      %1708 = vmatprep.subr.mxu0 0.0
      %1709 = vmatpush1.msra.mxu0 0.0
      %1710 = vmatprep.subr.mxu0 0.0
      %1711 = vmatpush1.msra.mxu0 0.0
      %1712 = vmatprep.subr.mxu0 0.0
      %1713 = vmatpush1.msra.mxu0 0.0
      %1714 = vmatprep.subr.mxu0 0.0
      %1715 = vmatpush1.msra.mxu0 0.0
      %1716 = vmatprep.subr.mxu0 0.0
      %1717 = vmatpush1.msra.mxu0 0.0
      %1718 = vmatprep.subr.mxu0 0.0
      %1719 = vmatpush1.msra.mxu0 0.0
      %1720 = vmatprep.subr.mxu0 0.0
      %1721 = vmatpush1.msra.mxu0 0.0
      %1722 = vmatprep.subr.mxu0 0.0
      %1723 = vmatpush1.msra.mxu0 0.0
      %1724 = vmatprep.subr.mxu0 0.0
      %1725 = vmatpush1.msra.mxu0 0.0
      %1726 = vmatprep.subr.mxu0 0.0
      %1727 = vmatpush1.msra.mxu0 0.0
      %1728 = vmatprep.subr.mxu0 0.0
      %1729 = vmatpush1.msra.mxu0 0.0
      %1730 = vmatprep.subr.mxu0 0.0
      %1731 = vmatpush1.msra.mxu0 0.0
      %1732 = vmatprep.subr.mxu0 0.0
      %1733 = vmatpush1.msra.mxu0 0.0
      %1734 = vmatprep.subr.mxu0 0.0
      %1735 = vmatpush1.msra.mxu0 0.0
      %1736 = vmatprep.subr.mxu0 0.0
      %1737 = vmatpush1.msra.mxu0 0.0
      %1738 = vmatprep.subr.mxu0 0.0
      %1739 = vmatpush1.msra.mxu0 0.0
      %1740 = vmatprep.mubr.f32.mxu0 0.0
      %1741 = vmatmul.mubr.f32.gmra.mrb[0].mxu0 %v1626
      %v1742 = vpop.f32.mrb[0].mxu0
      %v1743 = vadd.f32 %v1623, %v1742
      %v1744 = vpop.f32.mrb[0].mxu0
      %1745 = vmatprep.mubr.f32.mxu0 0.0
      %1746 = vmatmul.mubr.f32.gmra.mrb[0].mxu0 %v1629
      %v1747 = vpop.f32.mrb[0].mxu0
      %v1748 = vadd.f32 %v1623, %v1747
      %v1749 = vpop.f32.mrb[0].mxu0
      %1750 = vmatprep.mubr.f32.mxu0 0.0
      %1751 = vmatmul.mubr.f32.gmra.mrb[0].mxu0 %v1632
      %v1752 = vpop.f32.mrb[0].mxu0
      %v1753 = vadd.f32 %v1623, %v1752
      %v1754 = vpop.f32.mrb[0].mxu0
      %1755 = vmatprep.mubr.f32.mxu0 0.0
      %1756 = vmatmul.mubr.f32.gmra.mrb[0].mxu0 %v1635
      %v1757 = vpop.f32.mrb[0].mxu0
      %v1758 = vadd.f32 %v1623, %v1757
      %v1759 = vpop.f32.mrb[0].mxu0
      %1760 = vmatprep.mubr.f32.mxu0 0.0
      %1761 = vmatmul.mubr.f32.gmra.mrb[0].mxu0 %v1638
      %v1762 = vpop.f32.mrb[0].mxu0
      %v1763 = vadd.f32 %v1623, %v1762
      %v1764 = vpop.f32.mrb[0].mxu0
      %1765 = vmatprep.mubr.f32.mxu0 0.0
      %1766 = vmatmul.mubr.f32.gmra.mrb[0].mxu0 %v1641
      %v1767 = vpop.f32.mrb[0].mxu0
      %v1768 = vadd.f32 %v1623, %v1767
      %v1769 = vpop.f32.mrb[0].mxu0
      %1770 = vmatprep.mubr.f32.mxu0 0.0
      %1771 = vmatmul.mubr.f32.gmra.mrb[0].mxu0 %v1644
      %v1772 = vpop.f32.mrb[0].mxu0
      %v1773 = vadd.f32 %v1623, %v1772
      %v1774 = vpop.f32.mrb[0].mxu0
      %1775 = vmatprep.mubr.f32.mxu0 0.0
      %1776 = vmatmul.mubr.f32.gmra.mrb[0].mxu0 %v1647
      %v1777 = vpop.f32.mrb[0].mxu0
      %v1778 = vadd.f32 %v1623, %v1777
      %v1779 = vpop.f32.mrb[0].mxu0
      %1780 = vmatprep.mubr.f32.mxu0 0.0
      %1781 = vmatmul.mubr.f32.gmra.mrb[0].mxu0 %v1650
      %v1782 = vpop.f32.mrb[0].mxu0
      %v1783 = vadd.f32 %v1623, %v1782
      %v1784 = vpop.f32.mrb[0].mxu0
      %1785 = vmatprep.mubr.f32.mxu0 0.0
      %1786 = vmatmul.mubr.f32.gmra.mrb[0].mxu0 %v1653
      %v1787 = vpop.f32.mrb[0].mxu0
      %v1788 = vadd.f32 %v1623, %v1787
      %v1789 = vpop.f32.mrb[0].mxu0
      %1790 = vmatprep.mubr.f32.mxu0 0.0
      %1791 = vmatmul.mubr.f32.gmra.mrb[0].mxu0 %v1656
      %v1792 = vpop.f32.mrb[0].mxu0
      %v1793 = vadd.f32 %v1623, %v1792
      %v1794 = vpop.f32.mrb[0].mxu0
      %1795 = vmatprep.mubr.f32.mxu0 0.0
      %1796 = vmatmul.mubr.f32.gmra.mrb[0].mxu0 %v1659
      %v1797 = vpop.f32.mrb[0].mxu0
      %v1798 = vadd.f32 %v1623, %v1797
      %v1799 = vpop.f32.mrb[0].mxu0
      %1800 = vmatprep.mubr.f32.mxu0 0.0
      %1801 = vmatmul.mubr.f32.gmra.mrb[0].mxu0 %v1662
      %v1802 = vpop.f32.mrb[0].mxu0
      %v1803 = vadd.f32 %v1623, %v1802
      %v1804 = vpop.f32.mrb[0].mxu0
      %1805 = vmatprep.mubr.f32.mxu0 0.0
      %1806 = vmatmul.mubr.f32.gmra.mrb[0].mxu0 %v1665
      %v1807 = vpop.f32.mrb[0].mxu0
      %v1808 = vadd.f32 %v1623, %v1807
      %v1809 = vpop.f32.mrb[0].mxu0
      %1810 = vmatprep.mubr.f32.mxu0 0.0
      %1811 = vmatmul.mubr.f32.gmra.mrb[0].mxu0 %v1668
      %v1812 = vpop.f32.mrb[0].mxu0
      %v1813 = vadd.f32 %v1623, %v1812
      %v1814 = vpop.f32.mrb[0].mxu0
      %1815 = vmatprep.mubr.f32.mxu0 0.0
      %1816 = vmatmul.mubr.f32.gmra.mrb[0].mxu0 %v1671
      %v1817 = vpop.f32.mrb[0].mxu0
      %v1818 = vadd.f32 %v1623, %v1817
      %v1819 = vpop.f32.mrb[0].mxu0
      %1820 = vdwg.mxu0
      %v1821 = vadd.f32 %v546, %v1743
      %v1822 = vadd.f32 %v547, %v1748
      %v1823 = vadd.f32 %v548, %v1753
      %v1824 = vadd.f32 %v549, %v1758
      %v1825 = vadd.f32 %v550, %v1763
      %v1826 = vadd.f32 %v551, %v1768
      %v1827 = vadd.f32 %v552, %v1773
      %v1828 = vadd.f32 %v553, %v1778
      %v1829 = vadd.f32 %v554, %v1783
      %v1830 = vadd.f32 %v555, %v1788
      %v1831 = vadd.f32 %v556, %v1793
      %v1832 = vadd.f32 %v557, %v1798
      %v1833 = vadd.f32 %v558, %v1803
      %v1834 = vadd.f32 %v559, %v1808
      %v1835 = vadd.f32 %v560, %v1813
      %v1836 = vadd.f32 %v561, %v1818
      %v1837 = vsel %vm574, %v1821, 0.0
      %1838 = vadd.xlane.f32.xlu0 %v1837
      %v1839 = vpop.xlane.xlu0 %1838
      %v1840 = vsel %vm574, %v1822, 0.0
      %1841 = vadd.xlane.f32.xlu0 %v1840
      %v1842 = vpop.xlane.xlu0 %1841
      %v1843 = vsel %vm574, %v1823, 0.0
      %1844 = vadd.xlane.f32.xlu0 %v1843
      %v1845 = vpop.xlane.xlu0 %1844
      %v1846 = vsel %vm574, %v1824, 0.0
      %1847 = vadd.xlane.f32.xlu0 %v1846
      %v1848 = vpop.xlane.xlu0 %1847
      %v1849 = vsel %vm574, %v1825, 0.0
      %1850 = vadd.xlane.f32.xlu0 %v1849
      %v1851 = vpop.xlane.xlu0 %1850
      %v1852 = vsel %vm574, %v1826, 0.0
      %1853 = vadd.xlane.f32.xlu0 %v1852
      %v1854 = vpop.xlane.xlu0 %1853
      %v1855 = vsel %vm574, %v1827, 0.0
      %1856 = vadd.xlane.f32.xlu0 %v1855
      %v1857 = vpop.xlane.xlu0 %1856
      %v1858 = vsel %vm574, %v1828, 0.0
      %1859 = vadd.xlane.f32.xlu0 %v1858
      %v1860 = vpop.xlane.xlu0 %1859
      %v1861 = vsel %vm574, %v1829, 0.0
      %1862 = vadd.xlane.f32.xlu0 %v1861
      %v1863 = vpop.xlane.xlu0 %1862
      %v1864 = vsel %vm574, %v1830, 0.0
      %1865 = vadd.xlane.f32.xlu0 %v1864
      %v1866 = vpop.xlane.xlu0 %1865
      %v1867 = vsel %vm574, %v1831, 0.0
      %1868 = vadd.xlane.f32.xlu0 %v1867
      %v1869 = vpop.xlane.xlu0 %1868
      %v1870 = vsel %vm574, %v1832, 0.0
      %1871 = vadd.xlane.f32.xlu0 %v1870
      %v1872 = vpop.xlane.xlu0 %1871
      %v1873 = vsel %vm574, %v1833, 0.0
      %1874 = vadd.xlane.f32.xlu0 %v1873
      %v1875 = vpop.xlane.xlu0 %1874
      %v1876 = vsel %vm574, %v1834, 0.0
      %1877 = vadd.xlane.f32.xlu0 %v1876
      %v1878 = vpop.xlane.xlu0 %1877
      %v1879 = vsel %vm574, %v1835, 0.0
      %1880 = vadd.xlane.f32.xlu0 %v1879
      %v1881 = vpop.xlane.xlu0 %1880
      %v1882 = vsel %vm574, %v1836, 0.0
      %1883 = vadd.xlane.f32.xlu0 %v1882
      %v1884 = vpop.xlane.xlu0 %1883
      %v1885 = vrcp.pop 4.0
      %v1886 = vmul.f32 %v1839, %v1885
      %v1887 = vmul.f32 %v1842, %v1885
      %v1888 = vmul.f32 %v1845, %v1885
      %v1889 = vmul.f32 %v1848, %v1885
      %v1890 = vmul.f32 %v1851, %v1885
      %v1891 = vmul.f32 %v1854, %v1885
      %v1892 = vmul.f32 %v1857, %v1885
      %v1893 = vmul.f32 %v1860, %v1885
      %v1894 = vmul.f32 %v1863, %v1885
      %v1895 = vmul.f32 %v1866, %v1885
      %v1896 = vmul.f32 %v1869, %v1885
      %v1897 = vmul.f32 %v1872, %v1885
      %v1898 = vmul.f32 %v1875, %v1885
      %v1899 = vmul.f32 %v1878, %v1885
      %v1900 = vmul.f32 %v1881, %v1885
      %v1901 = vmul.f32 %v1884, %v1885
      %v1902 = vsub.f32 %v1821, %v1886
      %v1903 = vsub.f32 %v1822, %v1887
      %v1904 = vsub.f32 %v1823, %v1888
      %v1905 = vsub.f32 %v1824, %v1889
      %v1906 = vsub.f32 %v1825, %v1890
      %v1907 = vsub.f32 %v1826, %v1891
      %v1908 = vsub.f32 %v1827, %v1892
      %v1909 = vsub.f32 %v1828, %v1893
      %v1910 = vsub.f32 %v1829, %v1894
      %v1911 = vsub.f32 %v1830, %v1895
      %v1912 = vsub.f32 %v1831, %v1896
      %v1913 = vsub.f32 %v1832, %v1897
      %v1914 = vsub.f32 %v1833, %v1898
      %v1915 = vsub.f32 %v1834, %v1899
      %v1916 = vsub.f32 %v1835, %v1900
      %v1917 = vsub.f32 %v1836, %v1901
      %v1918 = vmul.f32 %v1902, %v1902
      %v1919 = vmul.f32 %v1903, %v1903
      %v1920 = vmul.f32 %v1904, %v1904
      %v1921 = vmul.f32 %v1905, %v1905
      %v1922 = vmul.f32 %v1906, %v1906
      %v1923 = vmul.f32 %v1907, %v1907
      %v1924 = vmul.f32 %v1908, %v1908
      %v1925 = vmul.f32 %v1909, %v1909
      %v1926 = vmul.f32 %v1910, %v1910
      %v1927 = vmul.f32 %v1911, %v1911
      %v1928 = vmul.f32 %v1912, %v1912
      %v1929 = vmul.f32 %v1913, %v1913
      %v1930 = vmul.f32 %v1914, %v1914
      %v1931 = vmul.f32 %v1915, %v1915
      %v1932 = vmul.f32 %v1916, %v1916
      %v1933 = vmul.f32 %v1917, %v1917
      %v1934 = vsel %vm574, %v1918, 0.0
      %1935 = vadd.xlane.f32.xlu0 %v1934
      %v1936 = vpop.xlane.xlu0 %1935
      %v1937 = vsel %vm574, %v1919, 0.0
      %1938 = vadd.xlane.f32.xlu0 %v1937
      %v1939 = vpop.xlane.xlu0 %1938
      %v1940 = vsel %vm574, %v1920, 0.0
      %1941 = vadd.xlane.f32.xlu0 %v1940
      %v1942 = vpop.xlane.xlu0 %1941
      %v1943 = vsel %vm574, %v1921, 0.0
      %1944 = vadd.xlane.f32.xlu0 %v1943
      %v1945 = vpop.xlane.xlu0 %1944
      %v1946 = vsel %vm574, %v1922, 0.0
      %1947 = vadd.xlane.f32.xlu0 %v1946
      %v1948 = vpop.xlane.xlu0 %1947
      %v1949 = vsel %vm574, %v1923, 0.0
      %1950 = vadd.xlane.f32.xlu0 %v1949
      %v1951 = vpop.xlane.xlu0 %1950
      %v1952 = vsel %vm574, %v1924, 0.0
      %1953 = vadd.xlane.f32.xlu0 %v1952
      %v1954 = vpop.xlane.xlu0 %1953
      %v1955 = vsel %vm574, %v1925, 0.0
      %1956 = vadd.xlane.f32.xlu0 %v1955
      %v1957 = vpop.xlane.xlu0 %1956
      %v1958 = vsel %vm574, %v1926, 0.0
      %1959 = vadd.xlane.f32.xlu0 %v1958
      %v1960 = vpop.xlane.xlu0 %1959
      %v1961 = vsel %vm574, %v1927, 0.0
      %1962 = vadd.xlane.f32.xlu0 %v1961
      %v1963 = vpop.xlane.xlu0 %1962
      %v1964 = vsel %vm574, %v1928, 0.0
      %1965 = vadd.xlane.f32.xlu0 %v1964
      %v1966 = vpop.xlane.xlu0 %1965
      %v1967 = vsel %vm574, %v1929, 0.0
      %1968 = vadd.xlane.f32.xlu0 %v1967
      %v1969 = vpop.xlane.xlu0 %1968
      %v1970 = vsel %vm574, %v1930, 0.0
      %1971 = vadd.xlane.f32.xlu0 %v1970
      %v1972 = vpop.xlane.xlu0 %1971
      %v1973 = vsel %vm574, %v1931, 0.0
      %1974 = vadd.xlane.f32.xlu0 %v1973
      %v1975 = vpop.xlane.xlu0 %1974
      %v1976 = vsel %vm574, %v1932, 0.0
      %1977 = vadd.xlane.f32.xlu0 %v1976
      %v1978 = vpop.xlane.xlu0 %1977
      %v1979 = vsel %vm574, %v1933, 0.0
      %1980 = vadd.xlane.f32.xlu0 %v1979
      %v1981 = vpop.xlane.xlu0 %1980
      %v1982 = vmul.f32 %v1936, %v1885
      %v1983 = vmul.f32 %v1939, %v1885
      %v1984 = vmul.f32 %v1942, %v1885
      %v1985 = vmul.f32 %v1945, %v1885
      %v1986 = vmul.f32 %v1948, %v1885
      %v1987 = vmul.f32 %v1951, %v1885
      %v1988 = vmul.f32 %v1954, %v1885
      %v1989 = vmul.f32 %v1957, %v1885
      %v1990 = vmul.f32 %v1960, %v1885
      %v1991 = vmul.f32 %v1963, %v1885
      %v1992 = vmul.f32 %v1966, %v1885
      %v1993 = vmul.f32 %v1969, %v1885
      %v1994 = vmul.f32 %v1972, %v1885
      %v1995 = vmul.f32 %v1975, %v1885
      %v1996 = vmul.f32 %v1978, %v1885
      %v1997 = vmul.f32 %v1981, %v1885
      %v1998 = vadd.f32 %v1982, 1e-05
      %v1999 = vadd.f32 %v1983, 1e-05
      %v2000 = vadd.f32 %v1984, 1e-05
      %v2001 = vadd.f32 %v1985, 1e-05
      %v2002 = vadd.f32 %v1986, 1e-05
      %v2003 = vadd.f32 %v1987, 1e-05
      %v2004 = vadd.f32 %v1988, 1e-05
      %v2005 = vadd.f32 %v1989, 1e-05
      %v2006 = vadd.f32 %v1990, 1e-05
      %v2007 = vadd.f32 %v1991, 1e-05
      %v2008 = vadd.f32 %v1992, 1e-05
      %v2009 = vadd.f32 %v1993, 1e-05
      %v2010 = vadd.f32 %v1994, 1e-05
      %v2011 = vadd.f32 %v1995, 1e-05
      %v2012 = vadd.f32 %v1996, 1e-05
      %v2013 = vadd.f32 %v1997, 1e-05
      %v2014 = vrsqrt.pop %v1998
      %v2015 = vrsqrt.pop %v1999
      %v2016 = vrsqrt.pop %v2000
      %v2017 = vrsqrt.pop %v2001
      %v2018 = vrsqrt.pop %v2002
      %v2019 = vrsqrt.pop %v2003
      %v2020 = vrsqrt.pop %v2004
      %v2021 = vrsqrt.pop %v2005
      %v2022 = vrsqrt.pop %v2006
      %v2023 = vrsqrt.pop %v2007
      %v2024 = vrsqrt.pop %v2008
      %v2025 = vrsqrt.pop %v2009
      %v2026 = vrsqrt.pop %v2010
      %v2027 = vrsqrt.pop %v2011
      %v2028 = vrsqrt.pop %v2012
      %v2029 = vrsqrt.pop %v2013
      %v2030 = vmul.f32 %v1902, %v2014
      %v2031 = vmul.f32 %v1903, %v2015
      %v2032 = vmul.f32 %v1904, %v2016
      %v2033 = vmul.f32 %v1905, %v2017
      %v2034 = vmul.f32 %v1906, %v2018
      %v2035 = vmul.f32 %v1907, %v2019
      %v2036 = vmul.f32 %v1908, %v2020
      %v2037 = vmul.f32 %v1909, %v2021
      %v2038 = vmul.f32 %v1910, %v2022
      %v2039 = vmul.f32 %v1911, %v2023
      %v2040 = vmul.f32 %v1912, %v2024
      %v2041 = vmul.f32 %v1913, %v2025
      %v2042 = vmul.f32 %v1914, %v2026
      %v2043 = vmul.f32 %v1915, %v2027
      %v2044 = vmul.f32 %v1916, %v2028
      %v2045 = vmul.f32 %v1917, %v2029
      %v2046 = vld [vmem:[%s8] sm:$0x1]
      %v2048 = vlaneseq
      %v2049 = vshrl.u32 %v2048, 7
      %v2050 = vsub.s32 0, %v2049
      %v2051 = vrot.slane %v2046, %v2050
      %v2053 = vmul.f32 %v2030, %v2051
      %v2054 = vmul.f32 %v2031, %v2051
      %v2055 = vmul.f32 %v2032, %v2051
      %v2056 = vmul.f32 %v2033, %v2051
      %v2057 = vmul.f32 %v2034, %v2051
      %v2058 = vmul.f32 %v2035, %v2051
      %v2059 = vmul.f32 %v2036, %v2051
      %v2060 = vmul.f32 %v2037, %v2051
      %v2061 = vmul.f32 %v2038, %v2051
      %v2062 = vmul.f32 %v2039, %v2051
      %v2063 = vmul.f32 %v2040, %v2051
      %v2064 = vmul.f32 %v2041, %v2051
      %v2065 = vmul.f32 %v2042, %v2051
      %v2066 = vmul.f32 %v2043, %v2051
      %v2067 = vmul.f32 %v2044, %v2051
      %v2068 = vmul.f32 %v2045, %v2051
      %v2069 = vld [vmem:[%s9] sm:$0x1]
      %v2071 = vlaneseq
      %v2072 = vshrl.u32 %v2071, 7
      %v2073 = vsub.s32 0, %v2072
      %v2074 = vrot.slane %v2069, %v2073
      %v2076 = vadd.f32 %v2053, %v2074
      %v2077 = vadd.f32 %v2054, %v2074
      %v2078 = vadd.f32 %v2055, %v2074
      %v2079 = vadd.f32 %v2056, %v2074
      %v2080 = vadd.f32 %v2057, %v2074
      %v2081 = vadd.f32 %v2058, %v2074
      %v2082 = vadd.f32 %v2059, %v2074
      %v2083 = vadd.f32 %v2060, %v2074
      %v2084 = vadd.f32 %v2061, %v2074
      %v2085 = vadd.f32 %v2062, %v2074
      %v2086 = vadd.f32 %v2063, %v2074
      %v2087 = vadd.f32 %v2064, %v2074
      %v2088 = vadd.f32 %v2065, %v2074
      %v2089 = vadd.f32 %v2066, %v2074
      %v2090 = vadd.f32 %v2067, %v2074
      %v2091 = vadd.f32 %v2068, %v2074
      %v2092 = vld [vmem:[%s10] sm:$0xf]
      %v2093 = vld [vmem:[%s11] sm:$0x1]
      %v2095 = vlaneseq
      %v2096 = vshrl.u32 %v2095, 7
      %v2097 = vsub.s32 0, %v2096
      %v2098 = vrot.slane %v2093, %v2097
      %v2101 = vsel %vm574, %v2076, 0
      %v2104 = vsel %vm574, %v2077, 0
      %v2107 = vsel %vm574, %v2078, 0
      %v2110 = vsel %vm574, %v2079, 0
      %v2113 = vsel %vm574, %v2080, 0
      %v2116 = vsel %vm574, %v2081, 0
      %v2119 = vsel %vm574, %v2082, 0
      %v2122 = vsel %vm574, %v2083, 0
      %v2125 = vsel %vm574, %v2084, 0
      %v2128 = vsel %vm574, %v2085, 0
      %v2131 = vsel %vm574, %v2086, 0
      %v2134 = vsel %vm574, %v2087, 0
      %v2137 = vsel %vm574, %v2088, 0
      %v2140 = vsel %vm574, %v2089, 0
      %v2143 = vsel %vm574, %v2090, 0
      %v2146 = vsel %vm574, %v2091, 0
      %v2149 = vsel %vm635, %v2092, 0
      %2151 = vmatprep.subr.mxu0 0.0
      %2152 = vmatpush1.msra.mxu0 %v2149
      %2153 = vmatprep.subr.mxu0 0.0
      %2154 = vmatpush1.msra.mxu0 0.0
      %2155 = vmatprep.subr.mxu0 0.0
      %2156 = vmatpush1.msra.mxu0 0.0
      %2157 = vmatprep.subr.mxu0 0.0
      %2158 = vmatpush1.msra.mxu0 0.0
      %2159 = vmatprep.subr.mxu0 0.0
      %2160 = vmatpush1.msra.mxu0 0.0
      %2161 = vmatprep.subr.mxu0 0.0
      %2162 = vmatpush1.msra.mxu0 0.0
      %2163 = vmatprep.subr.mxu0 0.0
      %2164 = vmatpush1.msra.mxu0 0.0
      %2165 = vmatprep.subr.mxu0 0.0
      %2166 = vmatpush1.msra.mxu0 0.0
      %2167 = vmatprep.subr.mxu0 0.0
      %2168 = vmatpush1.msra.mxu0 0.0
      %2169 = vmatprep.subr.mxu0 0.0
      %2170 = vmatpush1.msra.mxu0 0.0
      %2171 = vmatprep.subr.mxu0 0.0
      %2172 = vmatpush1.msra.mxu0 0.0
      %2173 = vmatprep.subr.mxu0 0.0
      %2174 = vmatpush1.msra.mxu0 0.0
      %2175 = vmatprep.subr.mxu0 0.0
      %2176 = vmatpush1.msra.mxu0 0.0
      %2177 = vmatprep.subr.mxu0 0.0
      %2178 = vmatpush1.msra.mxu0 0.0
      %2179 = vmatprep.subr.mxu0 0.0
      %2180 = vmatpush1.msra.mxu0 0.0
      %2181 = vmatprep.subr.mxu0 0.0
      %2182 = vmatpush1.msra.mxu0 0.0
      %2183 = vmatprep.subr.mxu0 0.0
      %2184 = vmatpush1.msra.mxu0 0.0
      %2185 = vmatprep.subr.mxu0 0.0
      %2186 = vmatpush1.msra.mxu0 0.0
      %2187 = vmatprep.subr.mxu0 0.0
      %2188 = vmatpush1.msra.mxu0 0.0
      %2189 = vmatprep.subr.mxu0 0.0
      %2190 = vmatpush1.msra.mxu0 0.0
      %2191 = vmatprep.subr.mxu0 0.0
      %2192 = vmatpush1.msra.mxu0 0.0
      %2193 = vmatprep.subr.mxu0 0.0
      %2194 = vmatpush1.msra.mxu0 0.0
      %2195 = vmatprep.subr.mxu0 0.0
      %2196 = vmatpush1.msra.mxu0 0.0
      %2197 = vmatprep.subr.mxu0 0.0
      %2198 = vmatpush1.msra.mxu0 0.0
      %2199 = vmatprep.subr.mxu0 0.0
      %2200 = vmatpush1.msra.mxu0 0.0
      %2201 = vmatprep.subr.mxu0 0.0
      %2202 = vmatpush1.msra.mxu0 0.0
      %2203 = vmatprep.subr.mxu0 0.0
      %2204 = vmatpush1.msra.mxu0 0.0
      %2205 = vmatprep.subr.mxu0 0.0
      %2206 = vmatpush1.msra.mxu0 0.0
      %2207 = vmatprep.subr.mxu0 0.0
      %2208 = vmatpush1.msra.mxu0 0.0
      %2209 = vmatprep.subr.mxu0 0.0
      %2210 = vmatpush1.msra.mxu0 0.0
      %2211 = vmatprep.subr.mxu0 0.0
      %2212 = vmatpush1.msra.mxu0 0.0
      %2213 = vmatprep.subr.mxu0 0.0
      %2214 = vmatpush1.msra.mxu0 0.0
      %2215 = vmatprep.mubr.f32.mxu0 0.0
      %2216 = vmatmul.mubr.f32.gmra.mrb[0].mxu0 %v2101
      %v2217 = vpop.f32.mrb[0].mxu0
      %v2218 = vadd.f32 %v2098, %v2217
      %v2219 = vpop.f32.mrb[0].mxu0
      %2220 = vmatprep.mubr.f32.mxu0 0.0
      %2221 = vmatmul.mubr.f32.gmra.mrb[0].mxu0 %v2104
      %v2222 = vpop.f32.mrb[0].mxu0
      %v2223 = vadd.f32 %v2098, %v2222
      %v2224 = vpop.f32.mrb[0].mxu0
      %2225 = vmatprep.mubr.f32.mxu0 0.0
      %2226 = vmatmul.mubr.f32.gmra.mrb[0].mxu0 %v2107
      %v2227 = vpop.f32.mrb[0].mxu0
      %v2228 = vadd.f32 %v2098, %v2227
      %v2229 = vpop.f32.mrb[0].mxu0
      %2230 = vmatprep.mubr.f32.mxu0 0.0
      %2231 = vmatmul.mubr.f32.gmra.mrb[0].mxu0 %v2110
      %v2232 = vpop.f32.mrb[0].mxu0
      %v2233 = vadd.f32 %v2098, %v2232
      %v2234 = vpop.f32.mrb[0].mxu0
      %2235 = vmatprep.mubr.f32.mxu0 0.0
      %2236 = vmatmul.mubr.f32.gmra.mrb[0].mxu0 %v2113
      %v2237 = vpop.f32.mrb[0].mxu0
      %v2238 = vadd.f32 %v2098, %v2237
      %v2239 = vpop.f32.mrb[0].mxu0
      %2240 = vmatprep.mubr.f32.mxu0 0.0
      %2241 = vmatmul.mubr.f32.gmra.mrb[0].mxu0 %v2116
      %v2242 = vpop.f32.mrb[0].mxu0
      %v2243 = vadd.f32 %v2098, %v2242
      %v2244 = vpop.f32.mrb[0].mxu0
      %2245 = vmatprep.mubr.f32.mxu0 0.0
      %2246 = vmatmul.mubr.f32.gmra.mrb[0].mxu0 %v2119
      %v2247 = vpop.f32.mrb[0].mxu0
      %v2248 = vadd.f32 %v2098, %v2247
      %v2249 = vpop.f32.mrb[0].mxu0
      %2250 = vmatprep.mubr.f32.mxu0 0.0
      %2251 = vmatmul.mubr.f32.gmra.mrb[0].mxu0 %v2122
      %v2252 = vpop.f32.mrb[0].mxu0
      %v2253 = vadd.f32 %v2098, %v2252
      %v2254 = vpop.f32.mrb[0].mxu0
      %2255 = vmatprep.mubr.f32.mxu0 0.0
      %2256 = vmatmul.mubr.f32.gmra.mrb[0].mxu0 %v2125
      %v2257 = vpop.f32.mrb[0].mxu0
      %v2258 = vadd.f32 %v2098, %v2257
      %v2259 = vpop.f32.mrb[0].mxu0
      %2260 = vmatprep.mubr.f32.mxu0 0.0
      %2261 = vmatmul.mubr.f32.gmra.mrb[0].mxu0 %v2128
      %v2262 = vpop.f32.mrb[0].mxu0
      %v2263 = vadd.f32 %v2098, %v2262
      %v2264 = vpop.f32.mrb[0].mxu0
      %2265 = vmatprep.mubr.f32.mxu0 0.0
      %2266 = vmatmul.mubr.f32.gmra.mrb[0].mxu0 %v2131
      %v2267 = vpop.f32.mrb[0].mxu0
      %v2268 = vadd.f32 %v2098, %v2267
      %v2269 = vpop.f32.mrb[0].mxu0
      %2270 = vmatprep.mubr.f32.mxu0 0.0
      %2271 = vmatmul.mubr.f32.gmra.mrb[0].mxu0 %v2134
      %v2272 = vpop.f32.mrb[0].mxu0
      %v2273 = vadd.f32 %v2098, %v2272
      %v2274 = vpop.f32.mrb[0].mxu0
      %2275 = vmatprep.mubr.f32.mxu0 0.0
      %2276 = vmatmul.mubr.f32.gmra.mrb[0].mxu0 %v2137
      %v2277 = vpop.f32.mrb[0].mxu0
      %v2278 = vadd.f32 %v2098, %v2277
      %v2279 = vpop.f32.mrb[0].mxu0
      %2280 = vmatprep.mubr.f32.mxu0 0.0
      %2281 = vmatmul.mubr.f32.gmra.mrb[0].mxu0 %v2140
      %v2282 = vpop.f32.mrb[0].mxu0
      %v2283 = vadd.f32 %v2098, %v2282
      %v2284 = vpop.f32.mrb[0].mxu0
      %2285 = vmatprep.mubr.f32.mxu0 0.0
      %2286 = vmatmul.mubr.f32.gmra.mrb[0].mxu0 %v2143
      %v2287 = vpop.f32.mrb[0].mxu0
      %v2288 = vadd.f32 %v2098, %v2287
      %v2289 = vpop.f32.mrb[0].mxu0
      %2290 = vmatprep.mubr.f32.mxu0 0.0
      %2291 = vmatmul.mubr.f32.gmra.mrb[0].mxu0 %v2146
      %v2292 = vpop.f32.mrb[0].mxu0
      %v2293 = vadd.f32 %v2098, %v2292
      %v2294 = vpop.f32.mrb[0].mxu0
      %2295 = vdwg.mxu0
      %2312 = vrot.lane.b32.xlu0 %v2218, 124
      %v2313 = vpop.permute.xlu0 %2312
      %2314 = vrot.lane.b32.xlu0 %v2223, 124
      %v2315 = vpop.permute.xlu0 %2314
      %2316 = vrot.lane.b32.xlu0 %v2228, 124
      %v2317 = vpop.permute.xlu0 %2316
      %2318 = vrot.lane.b32.xlu0 %v2233, 124
      %v2319 = vpop.permute.xlu0 %2318
      %2320 = vrot.lane.b32.xlu0 %v2238, 124
      %v2321 = vpop.permute.xlu0 %2320
      %2322 = vrot.lane.b32.xlu0 %v2243, 124
      %v2323 = vpop.permute.xlu0 %2322
      %2324 = vrot.lane.b32.xlu0 %v2248, 124
      %v2325 = vpop.permute.xlu0 %2324
      %2326 = vrot.lane.b32.xlu0 %v2253, 124
      %v2327 = vpop.permute.xlu0 %2326
      %2328 = vrot.lane.b32.xlu0 %v2258, 124
      %v2329 = vpop.permute.xlu0 %2328
      %2330 = vrot.lane.b32.xlu0 %v2263, 124
      %v2331 = vpop.permute.xlu0 %2330
      %2332 = vrot.lane.b32.xlu0 %v2268, 124
      %v2333 = vpop.permute.xlu0 %2332
      %2334 = vrot.lane.b32.xlu0 %v2273, 124
      %v2335 = vpop.permute.xlu0 %2334
      %2336 = vrot.lane.b32.xlu0 %v2278, 124
      %v2337 = vpop.permute.xlu0 %2336
      %2338 = vrot.lane.b32.xlu0 %v2283, 124
      %v2339 = vpop.permute.xlu0 %2338
      %2340 = vrot.lane.b32.xlu0 %v2288, 124
      %v2341 = vpop.permute.xlu0 %2340
      %2342 = vrot.lane.b32.xlu0 %v2293, 124
      %v2343 = vpop.permute.xlu0 %2342
      %v2360 = vmul.f32 %v2218, %v2313
      %v2361 = vmul.f32 %v2223, %v2315
      %v2362 = vmul.f32 %v2228, %v2317
      %v2363 = vmul.f32 %v2233, %v2319
      %v2364 = vmul.f32 %v2238, %v2321
      %v2365 = vmul.f32 %v2243, %v2323
      %v2366 = vmul.f32 %v2248, %v2325
      %v2367 = vmul.f32 %v2253, %v2327
      %v2368 = vmul.f32 %v2258, %v2329
      %v2369 = vmul.f32 %v2263, %v2331
      %v2370 = vmul.f32 %v2268, %v2333
      %v2371 = vmul.f32 %v2273, %v2335
      %v2372 = vmul.f32 %v2278, %v2337
      %v2373 = vmul.f32 %v2283, %v2339
      %v2374 = vmul.f32 %v2288, %v2341
      %v2375 = vmul.f32 %v2293, %v2343
      %v2376 = vld [vmem:[%s12] sm:$0xf]
      %v2377 = vld [vmem:[%s13] sm:$0x1]
      %v2379 = vlaneseq
      %v2380 = vshrl.u32 %v2379, 7
      %v2381 = vsub.s32 0, %v2380
      %v2382 = vrot.slane %v2377, %v2381
      %v2385 = vsel %vm574, %v2360, 0
      %v2388 = vsel %vm574, %v2361, 0
      %v2391 = vsel %vm574, %v2362, 0
      %v2394 = vsel %vm574, %v2363, 0
      %v2397 = vsel %vm574, %v2364, 0
      %v2400 = vsel %vm574, %v2365, 0
      %v2403 = vsel %vm574, %v2366, 0
      %v2406 = vsel %vm574, %v2367, 0
      %v2409 = vsel %vm574, %v2368, 0
      %v2412 = vsel %vm574, %v2369, 0
      %v2415 = vsel %vm574, %v2370, 0
      %v2418 = vsel %vm574, %v2371, 0
      %v2421 = vsel %vm574, %v2372, 0
      %v2424 = vsel %vm574, %v2373, 0
      %v2427 = vsel %vm574, %v2374, 0
      %v2430 = vsel %vm574, %v2375, 0
      %v2433 = vsel %vm635, %v2376, 0
      %2435 = vmatprep.subr.mxu0 0.0
      %2436 = vmatpush1.msra.mxu0 %v2433
      %2437 = vmatprep.subr.mxu0 0.0
      %2438 = vmatpush1.msra.mxu0 0.0
      %2439 = vmatprep.subr.mxu0 0.0
      %2440 = vmatpush1.msra.mxu0 0.0
      %2441 = vmatprep.subr.mxu0 0.0
      %2442 = vmatpush1.msra.mxu0 0.0
      %2443 = vmatprep.subr.mxu0 0.0
      %2444 = vmatpush1.msra.mxu0 0.0
      %2445 = vmatprep.subr.mxu0 0.0
      %2446 = vmatpush1.msra.mxu0 0.0
      %2447 = vmatprep.subr.mxu0 0.0
      %2448 = vmatpush1.msra.mxu0 0.0
      %2449 = vmatprep.subr.mxu0 0.0
      %2450 = vmatpush1.msra.mxu0 0.0
      %2451 = vmatprep.subr.mxu0 0.0
      %2452 = vmatpush1.msra.mxu0 0.0
      %2453 = vmatprep.subr.mxu0 0.0
      %2454 = vmatpush1.msra.mxu0 0.0
      %2455 = vmatprep.subr.mxu0 0.0
      %2456 = vmatpush1.msra.mxu0 0.0
      %2457 = vmatprep.subr.mxu0 0.0
      %2458 = vmatpush1.msra.mxu0 0.0
      %2459 = vmatprep.subr.mxu0 0.0
      %2460 = vmatpush1.msra.mxu0 0.0
      %2461 = vmatprep.subr.mxu0 0.0
      %2462 = vmatpush1.msra.mxu0 0.0
      %2463 = vmatprep.subr.mxu0 0.0
      %2464 = vmatpush1.msra.mxu0 0.0
      %2465 = vmatprep.subr.mxu0 0.0
      %2466 = vmatpush1.msra.mxu0 0.0
      %2467 = vmatprep.subr.mxu0 0.0
      %2468 = vmatpush1.msra.mxu0 0.0
      %2469 = vmatprep.subr.mxu0 0.0
      %2470 = vmatpush1.msra.mxu0 0.0
      %2471 = vmatprep.subr.mxu0 0.0
      %2472 = vmatpush1.msra.mxu0 0.0
      %2473 = vmatprep.subr.mxu0 0.0
      %2474 = vmatpush1.msra.mxu0 0.0
      %2475 = vmatprep.subr.mxu0 0.0
      %2476 = vmatpush1.msra.mxu0 0.0
      %2477 = vmatprep.subr.mxu0 0.0
      %2478 = vmatpush1.msra.mxu0 0.0
      %2479 = vmatprep.subr.mxu0 0.0
      %2480 = vmatpush1.msra.mxu0 0.0
      %2481 = vmatprep.subr.mxu0 0.0
      %2482 = vmatpush1.msra.mxu0 0.0
      %2483 = vmatprep.subr.mxu0 0.0
      %2484 = vmatpush1.msra.mxu0 0.0
      %2485 = vmatprep.subr.mxu0 0.0
      %2486 = vmatpush1.msra.mxu0 0.0
      %2487 = vmatprep.subr.mxu0 0.0
      %2488 = vmatpush1.msra.mxu0 0.0
      %2489 = vmatprep.subr.mxu0 0.0
      %2490 = vmatpush1.msra.mxu0 0.0
      %2491 = vmatprep.subr.mxu0 0.0
      %2492 = vmatpush1.msra.mxu0 0.0
      %2493 = vmatprep.subr.mxu0 0.0
      %2494 = vmatpush1.msra.mxu0 0.0
      %2495 = vmatprep.subr.mxu0 0.0
      %2496 = vmatpush1.msra.mxu0 0.0
      %2497 = vmatprep.subr.mxu0 0.0
      %2498 = vmatpush1.msra.mxu0 0.0
      %2499 = vmatprep.mubr.f32.mxu0 0.0
      %2500 = vmatmul.mubr.f32.gmra.mrb[0].mxu0 %v2385
      %v2501 = vpop.f32.mrb[0].mxu0
      %v2502 = vadd.f32 %v2382, %v2501
      %v2503 = vpop.f32.mrb[0].mxu0
      %2504 = vmatprep.mubr.f32.mxu0 0.0
      %2505 = vmatmul.mubr.f32.gmra.mrb[0].mxu0 %v2388
      %v2506 = vpop.f32.mrb[0].mxu0
      %v2507 = vadd.f32 %v2382, %v2506
      %v2508 = vpop.f32.mrb[0].mxu0
      %2509 = vmatprep.mubr.f32.mxu0 0.0
      %2510 = vmatmul.mubr.f32.gmra.mrb[0].mxu0 %v2391
      %v2511 = vpop.f32.mrb[0].mxu0
      %v2512 = vadd.f32 %v2382, %v2511
      %v2513 = vpop.f32.mrb[0].mxu0
      %2514 = vmatprep.mubr.f32.mxu0 0.0
      %2515 = vmatmul.mubr.f32.gmra.mrb[0].mxu0 %v2394
      %v2516 = vpop.f32.mrb[0].mxu0
      %v2517 = vadd.f32 %v2382, %v2516
      %v2518 = vpop.f32.mrb[0].mxu0
      %2519 = vmatprep.mubr.f32.mxu0 0.0
      %2520 = vmatmul.mubr.f32.gmra.mrb[0].mxu0 %v2397
      %v2521 = vpop.f32.mrb[0].mxu0
      %v2522 = vadd.f32 %v2382, %v2521
      %v2523 = vpop.f32.mrb[0].mxu0
      %2524 = vmatprep.mubr.f32.mxu0 0.0
      %2525 = vmatmul.mubr.f32.gmra.mrb[0].mxu0 %v2400
      %v2526 = vpop.f32.mrb[0].mxu0
      %v2527 = vadd.f32 %v2382, %v2526
      %v2528 = vpop.f32.mrb[0].mxu0
      %2529 = vmatprep.mubr.f32.mxu0 0.0
      %2530 = vmatmul.mubr.f32.gmra.mrb[0].mxu0 %v2403
      %v2531 = vpop.f32.mrb[0].mxu0
      %v2532 = vadd.f32 %v2382, %v2531
      %v2533 = vpop.f32.mrb[0].mxu0
      %2534 = vmatprep.mubr.f32.mxu0 0.0
      %2535 = vmatmul.mubr.f32.gmra.mrb[0].mxu0 %v2406
      %v2536 = vpop.f32.mrb[0].mxu0
      %v2537 = vadd.f32 %v2382, %v2536
      %v2538 = vpop.f32.mrb[0].mxu0
      %2539 = vmatprep.mubr.f32.mxu0 0.0
      %2540 = vmatmul.mubr.f32.gmra.mrb[0].mxu0 %v2409
      %v2541 = vpop.f32.mrb[0].mxu0
      %v2542 = vadd.f32 %v2382, %v2541
      %v2543 = vpop.f32.mrb[0].mxu0
      %2544 = vmatprep.mubr.f32.mxu0 0.0
      %2545 = vmatmul.mubr.f32.gmra.mrb[0].mxu0 %v2412
      %v2546 = vpop.f32.mrb[0].mxu0
      %v2547 = vadd.f32 %v2382, %v2546
      %v2548 = vpop.f32.mrb[0].mxu0
      %2549 = vmatprep.mubr.f32.mxu0 0.0
      %2550 = vmatmul.mubr.f32.gmra.mrb[0].mxu0 %v2415
      %v2551 = vpop.f32.mrb[0].mxu0
      %v2552 = vadd.f32 %v2382, %v2551
      %v2553 = vpop.f32.mrb[0].mxu0
      %2554 = vmatprep.mubr.f32.mxu0 0.0
      %2555 = vmatmul.mubr.f32.gmra.mrb[0].mxu0 %v2418
      %v2556 = vpop.f32.mrb[0].mxu0
      %v2557 = vadd.f32 %v2382, %v2556
      %v2558 = vpop.f32.mrb[0].mxu0
      %2559 = vmatprep.mubr.f32.mxu0 0.0
      %2560 = vmatmul.mubr.f32.gmra.mrb[0].mxu0 %v2421
      %v2561 = vpop.f32.mrb[0].mxu0
      %v2562 = vadd.f32 %v2382, %v2561
      %v2563 = vpop.f32.mrb[0].mxu0
      %2564 = vmatprep.mubr.f32.mxu0 0.0
      %2565 = vmatmul.mubr.f32.gmra.mrb[0].mxu0 %v2424
      %v2566 = vpop.f32.mrb[0].mxu0
      %v2567 = vadd.f32 %v2382, %v2566
      %v2568 = vpop.f32.mrb[0].mxu0
      %2569 = vmatprep.mubr.f32.mxu0 0.0
      %2570 = vmatmul.mubr.f32.gmra.mrb[0].mxu0 %v2427
      %v2571 = vpop.f32.mrb[0].mxu0
      %v2572 = vadd.f32 %v2382, %v2571
      %v2573 = vpop.f32.mrb[0].mxu0
      %2574 = vmatprep.mubr.f32.mxu0 0.0
      %2575 = vmatmul.mubr.f32.gmra.mrb[0].mxu0 %v2430
      %v2576 = vpop.f32.mrb[0].mxu0
      %v2577 = vadd.f32 %v2382, %v2576
      %v2578 = vpop.f32.mrb[0].mxu0
      %2579 = vdwg.mxu0
      %v2580 = vadd.f32 %v1821, %v2502
      %v2581 = vadd.f32 %v1822, %v2507
      %v2582 = vadd.f32 %v1823, %v2512
      %v2583 = vadd.f32 %v1824, %v2517
      %v2584 = vadd.f32 %v1825, %v2522
      %v2585 = vadd.f32 %v1826, %v2527
      %v2586 = vadd.f32 %v1827, %v2532
      %v2587 = vadd.f32 %v1828, %v2537
      %v2588 = vadd.f32 %v1829, %v2542
      %v2589 = vadd.f32 %v1830, %v2547
      %v2590 = vadd.f32 %v1831, %v2552
      %v2591 = vadd.f32 %v1832, %v2557
      %v2592 = vadd.f32 %v1833, %v2562
      %v2593 = vadd.f32 %v1834, %v2567
      %v2594 = vadd.f32 %v1835, %v2572
      %v2595 = vadd.f32 %v1836, %v2577
      %2596 = vst.msk [vmem:[%s544] sm:$0xff] %vm574, %v2580
      %2597 = vst.msk [vmem:[%s544 + $0x8] sm:$0xff] %vm574, %v2581
      %2598 = vst.msk [vmem:[%s544 + $0x10] sm:$0xff] %vm574, %v2582
      %2599 = vst.msk [vmem:[%s544 + $0x18] sm:$0xff] %vm574, %v2583
      %2600 = vst.msk [vmem:[%s544 + $0x20] sm:$0xff] %vm574, %v2584
      %2601 = vst.msk [vmem:[%s544 + $0x28] sm:$0xff] %vm574, %v2585
      %2602 = vst.msk [vmem:[%s544 + $0x30] sm:$0xff] %vm574, %v2586
      %2603 = vst.msk [vmem:[%s544 + $0x38] sm:$0xff] %vm574, %v2587
      %2604 = vst.msk [vmem:[%s544 + $0x40] sm:$0xff] %vm574, %v2588
      %2605 = vst.msk [vmem:[%s544 + $0x48] sm:$0xff] %vm574, %v2589
      %2606 = vst.msk [vmem:[%s544 + $0x50] sm:$0xff] %vm574, %v2590
      %2607 = vst.msk [vmem:[%s544 + $0x58] sm:$0xff] %vm574, %v2591
      %2608 = vst.msk [vmem:[%s544 + $0x60] sm:$0xff] %vm574, %v2592
      %2609 = vst.msk [vmem:[%s544 + $0x68] sm:$0xff] %vm574, %v2593
      %2610 = vst.msk [vmem:[%s544 + $0x70] sm:$0xff] %vm574, %v2594
      %2611 = vst.msk [vmem:[%s544 + $0x78] sm:$0xff] %vm574, %v2595
      %s2612 = smul.u32 8, %s30
      %p2613 = scmp.lt.s32.totalorder %s29, 1
      %s2614 = scalar_select %p2613, %s29, 1
      %p2615 = scmp.lt.s32.totalorder %s2612, 15
      %s2616 = scalar_select %p2615, %s2612, 15
      %s2617 = smul.addr %s2616, 2
      %s2618 = smul.addr %s2614, 32
      %s2619 = sadd.s32 %s2617, %s2618
      %s2620 = smul.addr %s2619, 8
      %s2621 = scalar_lea.vmem %s14, %s2620
      // Predicated region
      $region77: #{tpu_custom_call.1} parent=75 // pred_check
        %p2622 = pneg %p365
      $region78: #{tpu_custom_call.1} parent=75 // pred_check_branch
        %2624 = sbr.rel (%p2622) target = $region80
      $region79: #{tpu_custom_call.1} parent=75 // pred_region
        %s2625 = smul.u32 8, %s30
      $region80: #{tpu_custom_call.1} parent=75 // pred_fallthru
        _
    $region76: #{tpu_custom_call.1} parent=5 // pred_fallthru
      _
    %p2626 = scmp.le.s32.totalorder 2, %s20
    // Predicated region
    $region81: #{tpu_custom_call.1} parent=5 // pred_check
      %p2627 = pneg %p2626
    $region82: #{tpu_custom_call.1} parent=5 // pred_check_branch
      %2629 = sbr.rel (%p2627) target = $region84
    $region83: #{tpu_custom_call.1} parent=5 // pred_region
      %s2630 = ssub.s32 %s20, 2
      // Predicated region
      $region85: #{tpu_custom_call.1} parent=83 // pred_check
        %p2631 = pneg %p371
      $region86: #{tpu_custom_call.1} parent=83 // pred_check_branch
        %2633 = sbr.rel (%p2631) target = $region88
      $region87: #{tpu_custom_call.1} parent=83 // pred_region
        %s2634 = smul.u32 8, %s32
        %p2635 = scmp.lt.s32.totalorder %s31, 1
        %s2636 = scalar_select %p2635, %s31, 1
        %p2637 = scmp.lt.s32.totalorder %s2634, 15
        %s2638 = scalar_select %p2637, %s2634, 15
        %s2639 = smul.addr %s2638, 2
        %s2640 = smul.addr %s2636, 32
        %s2641 = sadd.s32 %s2639, %s2640
        %s2642 = smul.addr %s2641, 8
        %s2643 = scalar_lea.vmem %s14, %s2642
      $region88: #{tpu_custom_call.1} parent=83 // pred_fallthru
        _
    $region84: #{tpu_custom_call.1} parent=5 // pred_fallthru
      _
  $region6: #{tpu_custom_call.1} parent=0 // loop_footer
    %s24 = sadd.s32 1, %s20
  $region7: #{tpu_custom_call.1} parent=0 // loop_footer_branch
    %19 = sbr.rel target = $region3
  $region8: #{tpu_custom_call.1} parent=0 // loop_exit
    _

</llo_original>
